<compile_context>
chip_gen: v6e
topology: v6e:2x2x1
jax: 0.10.0
libtpu: 0.0.40
codegen_flags: <defaults>
</compile_context>

<pallas_src>
import functools

import jax
import jax.numpy as jnp
from jax.experimental import pallas as pl
from jax.experimental.pallas import tpu as pltpu


def _mlp_kernel(x_ref, w1_ref, b1_ref, w2_ref, b2_ref, w3_ref, b3_ref, o_ref):
    # Fused Linear -> ReLU -> Linear -> ReLU -> Linear on the MXU/VPU.
    x = x_ref[...]
    h1 = jnp.dot(x, w1_ref[...], preferred_element_type=jnp.float32) + b1_ref[...]
    h1 = jnp.maximum(h1, 0.0)
    h2 = jnp.dot(h1, w2_ref[...], preferred_element_type=jnp.float32) + b2_ref[...]
    h2 = jnp.maximum(h2, 0.0)
    y = jnp.dot(h2, w3_ref[...], preferred_element_type=jnp.float32) + b3_ref[...]
    o_ref[...] = y.astype(o_ref.dtype)


def _round_up(n, m):
    return ((n + m - 1) // m) * m


@functools.partial(jax.jit, static_argnames=("n_joints", "n_points", "n_contacts"))
def gripper_decoder_forward(x, params, *, n_joints, n_points, n_contacts):
    """Pallas implementation of GripperDecoder.forward.

    x: any shape that flattens to (-1, n_joints)  (mirrors torch.reshape(x, (-1, n_joints)))
    returns dict with 'gripper_points' (B, n_points, 3) and 'contact_points' (B, n_contacts, 3)
    """
    w1, b1, w2, b2, w3, b3 = params
    x2d = jnp.reshape(x, (-1, n_joints))
    B = x2d.shape[0]
    out_dim = (n_points + n_contacts) * 3
    l0 = w1.shape[1]
    l1 = w2.shape[1]

    # Batch tile: large enough to fill the MXU rows (128 on v5e, 256 on
    # v6e/v7x), but never larger than the sublane-rounded batch itself.
    TB = min(256, _round_up(B, 8))
    B_pad = _round_up(B, TB)
    if B_pad != B:
        # Only pay the pad copy for ragged batches; padded rows are sliced off below.
        x2d = jnp.pad(x2d, ((0, B_pad - B), (0, 0)))

    grid = (B_pad // TB,)

    flops = 2 * B_pad * (n_joints * l0 + l0 * l1 + l1 * out_dim)
    bytes_accessed = 4 * (
        B_pad * n_joints + B_pad * out_dim            # activations in / out
        + n_joints * l0 + l0                          # W1, b1
        + l0 * l1 + l1                                # W2, b2
        + l1 * out_dim + out_dim                      # W3, b3
    )

    y = pl.pallas_call(
        _mlp_kernel,
        out_shape=jax.ShapeDtypeStruct((B_pad, out_dim), jnp.float32),
        grid_spec=pltpu.PrefetchScalarGridSpec(
            num_scalar_prefetch=0,
            grid=grid,
            in_specs=[
                pl.BlockSpec((TB, n_joints), lambda i: (i, 0)),   # x tile
                pl.BlockSpec(w1.shape, lambda i: (0, 0)),         # W1 (full, never re-DMAed)
                pl.BlockSpec(b1.shape, lambda i: (0, 0)),         # b1
                pl.BlockSpec(w2.shape, lambda i: (0, 0)),         # W2
                pl.BlockSpec(b2.shape, lambda i: (0, 0)),         # b2
                pl.BlockSpec(w3.shape, lambda i: (0, 0)),         # W3
                pl.BlockSpec(b3.shape, lambda i: (0, 0)),         # b3
            ],
            out_specs=pl.BlockSpec((TB, out_dim), lambda i: (i, 0)),
        ),
        compiler_params=pltpu.CompilerParams(
            dimension_semantics=("parallel",),
        ),
        cost_estimate=pl.CostEstimate(
            flops=flops, transcendentals=0, bytes_accessed=bytes_accessed
        ),
    )(x2d, w1, b1, w2, b2, w3, b3)

    if B_pad != B:
        y = y[:B]
    y = jnp.reshape(y, (-1, n_points + n_contacts, 3))
    return {
        "gripper_points": y[:, :n_points],
        "contact_points": y[:, n_points:],
    }


def init_params(key, n_joints, layers, n_points, n_contacts):
    """Deterministic synthetic parameters (shapes match the nn.Linear stack)."""
    l0, l1 = layers
    out_dim = (n_points + n_contacts) * 3
    ks = jax.random.split(key, 6)

    def linear(kw, kb, fan_in, fan_out):
        # Uniform(-1/sqrt(fan_in), 1/sqrt(fan_in)) like PyTorch default init.
        bound = 1.0 / jnp.sqrt(jnp.asarray(fan_in, jnp.float32))
        w = jax.random.uniform(kw, (fan_in, fan_out), jnp.float32, -bound, bound)
        b = jax.random.uniform(kb, (1, fan_out), jnp.float32, -bound, bound)
        return w, b

    w1, b1 = linear(ks[0], ks[1], n_joints, l0)
    w2, b2 = linear(ks[2], ks[3], l0, l1)
    w3, b3 = linear(ks[4], ks[5], l1, out_dim)
    return (w1, b1, w2, b2, w3, b3)


def _reference_forward(x, params, n_joints, n_points, n_contacts):
    w1, b1, w2, b2, w3, b3 = params
    x2d = jnp.reshape(x, (-1, n_joints))
    h = jnp.maximum(x2d @ w1 + b1, 0.0)
    h = jnp.maximum(h @ w2 + b2, 0.0)
    y = h @ w3 + b3
    y = jnp.reshape(y, (-1, n_points + n_contacts, 3))
    return y[:, :n_points], y[:, n_points:]


if __name__ == "__main__":
    # Shapes consistent with the module: n_joints=8, layers=(128, 256),
    # n_points=254, n_contacts=2 -> output feature dim = 256*3 = 768.
    n_joints, n_contacts, n_points = 8, 2, 254
    layers = (128, 256)

    key = jax.random.PRNGKey(0)
    k_x1, k_x2, k_p = jax.random.split(key, 3)
    params = init_params(k_p, n_joints, layers, n_points, n_contacts)

    ok = True

    # Case 1: batch = 512 -> TB = 256, grid = 2 (multi-step, no padding).
    x1 = jax.random.normal(k_x1, (512, n_joints), jnp.float32)
    out1 = gripper_decoder_forward(
        x1, params, n_joints=n_joints, n_points=n_points, n_contacts=n_contacts
    )
    gp1 = jax.block_until_ready(out1["gripper_points"])
    cp1 = jax.block_until_ready(out1["contact_points"])
    ref_gp1, ref_cp1 = _reference_forward(x1, params, n_joints, n_points, n_contacts)
    ok &= gp1.shape == (512, n_points, 3) and cp1.shape == (512, n_contacts, 3)
    ok &= bool(jnp.allclose(gp1, ref_gp1, atol=1e-4, rtol=1e-4))
    ok &= bool(jnp.allclose(cp1, ref_cp1, atol=1e-4, rtol=1e-4))

    # Case 2: ragged small batch = 12 -> TB = 16, padded then sliced.
    x2 = jax.random.normal(k_x2, (12, n_joints), jnp.float32)
    out2 = gripper_decoder_forward(
        x2, params, n_joints=n_joints, n_points=n_points, n_contacts=n_contacts
    )
    gp2 = jax.block_until_ready(out2["gripper_points"])
    cp2 = jax.block_until_ready(out2["contact_points"])
    ref_gp2, ref_cp2 = _reference_forward(x2, params, n_joints, n_points, n_contacts)
    ok &= gp2.shape == (12, n_points, 3) and cp2.shape == (12, n_contacts, 3)
    ok &= bool(jnp.allclose(gp2, ref_gp2, atol=1e-4, rtol=1e-4))
    ok &= bool(jnp.allclose(cp2, ref_cp2, atol=1e-4, rtol=1e-4))

    assert ok
    print("KERNEL_OK")
</pallas_src>

<mosaic_0001>
module attributes {stable_mosaic.version = 11 : i64} {
  func.func @_mlp_kernel(%arg0: i32, %arg1: memref<256x8xf32, #tpu.memory_space<vmem>>, %arg2: memref<8x128xf32, #tpu.memory_space<vmem>>, %arg3: memref<1x128xf32, #tpu.memory_space<vmem>>, %arg4: memref<128x256xf32, #tpu.memory_space<vmem>>, %arg5: memref<1x256xf32, #tpu.memory_space<vmem>>, %arg6: memref<256x768xf32, #tpu.memory_space<vmem>>, %arg7: memref<1x768xf32, #tpu.memory_space<vmem>>, %arg8: memref<256x768xf32, #tpu.memory_space<vmem>>) attributes {dimension_semantics = [#tpu.dimension_semantics<parallel>], iteration_bounds = array<i64: 2>, scalar_prefetch = 0 : i64, scratch_operands = 0 : i64, tpu.core_type = #tpu.core_type<tc>, window_params = [{transform_indices = @transform_0, window_bounds = array<i64: 256, 8>}, {pipeline_mode = #tpu.pipeline_mode<synchronous>, transform_indices = @transform_1, window_bounds = array<i64: 8, 128>}, {pipeline_mode = #tpu.pipeline_mode<synchronous>, transform_indices = @transform_2, window_bounds = array<i64: 1, 128>}, {pipeline_mode = #tpu.pipeline_mode<synchronous>, transform_indices = @transform_3, window_bounds = array<i64: 128, 256>}, {pipeline_mode = #tpu.pipeline_mode<synchronous>, transform_indices = @transform_4, window_bounds = array<i64: 1, 256>}, {pipeline_mode = #tpu.pipeline_mode<synchronous>, transform_indices = @transform_5, window_bounds = array<i64: 256, 768>}, {pipeline_mode = #tpu.pipeline_mode<synchronous>, transform_indices = @transform_6, window_bounds = array<i64: 1, 768>}, {transform_indices = @transform_7, window_bounds = array<i64: 256, 768>}]} {
    %c0 = arith.constant 0 : index
    %c0_0 = arith.constant 0 : index
    %0 = vector.load %arg1[%c0, %c0_0] : memref<256x8xf32, #tpu.memory_space<vmem>>, vector<256x8xf32>
    %c0_1 = arith.constant 0 : index
    %c0_2 = arith.constant 0 : index
    %1 = vector.load %arg2[%c0_1, %c0_2] : memref<8x128xf32, #tpu.memory_space<vmem>>, vector<8x128xf32>
    %cst = arith.constant dense<0.000000e+00> : vector<256x128xf32>
    %2 = tpu.matmul %0, %1, %cst {dimension_numbers = #tpu.dot_dimension_numbers<[1], [0], [0], [1], [0, 0, 1, 1], [], []>} : vector<256x8xf32>, vector<8x128xf32>, vector<256x128xf32> -> vector<256x128xf32>
    %c0_3 = arith.constant 0 : index
    %c0_4 = arith.constant 0 : index
    %3 = vector.load %arg3[%c0_3, %c0_4] : memref<1x128xf32, #tpu.memory_space<vmem>>, vector<1x128xf32>
    %4 = vector.broadcast %3 : vector<1x128xf32> to vector<256x128xf32>
    %5 = arith.addf %2, %4 : vector<256x128xf32>
    %cst_5 = arith.constant 0.000000e+00 : f32
    %6 = vector.broadcast %cst_5 : f32 to vector<256x128xf32>
    %7 = arith.maximumf %5, %6 : vector<256x128xf32>
    %c0_6 = arith.constant 0 : index
    %c0_7 = arith.constant 0 : index
    %8 = vector.load %arg4[%c0_6, %c0_7] : memref<128x256xf32, #tpu.memory_space<vmem>>, vector<128x256xf32>
    %cst_8 = arith.constant dense<0.000000e+00> : vector<256x256xf32>
    %9 = tpu.matmul %7, %8, %cst_8 {dimension_numbers = #tpu.dot_dimension_numbers<[1], [0], [0], [1], [0, 0, 1, 1], [], []>} : vector<256x128xf32>, vector<128x256xf32>, vector<256x256xf32> -> vector<256x256xf32>
    %c0_9 = arith.constant 0 : index
    %c0_10 = arith.constant 0 : index
    %10 = vector.load %arg5[%c0_9, %c0_10] : memref<1x256xf32, #tpu.memory_space<vmem>>, vector<1x256xf32>
    %11 = vector.broadcast %10 : vector<1x256xf32> to vector<256x256xf32>
    %12 = arith.addf %9, %11 : vector<256x256xf32>
    %cst_11 = arith.constant 0.000000e+00 : f32
    %13 = vector.broadcast %cst_11 : f32 to vector<256x256xf32>
    %14 = arith.maximumf %12, %13 : vector<256x256xf32>
    %c0_12 = arith.constant 0 : index
    %c0_13 = arith.constant 0 : index
    %15 = vector.load %arg6[%c0_12, %c0_13] : memref<256x768xf32, #tpu.memory_space<vmem>>, vector<256x768xf32>
    %cst_14 = arith.constant dense<0.000000e+00> : vector<256x768xf32>
    %16 = tpu.matmul %14, %15, %cst_14 {dimension_numbers = #tpu.dot_dimension_numbers<[1], [0], [0], [1], [0, 0, 1, 1], [], []>} : vector<256x256xf32>, vector<256x768xf32>, vector<256x768xf32> -> vector<256x768xf32>
    %c0_15 = arith.constant 0 : index
    %c0_16 = arith.constant 0 : index
    %17 = vector.load %arg7[%c0_15, %c0_16] : memref<1x768xf32, #tpu.memory_space<vmem>>, vector<1x768xf32>
    %18 = vector.broadcast %17 : vector<1x768xf32> to vector<256x768xf32>
    %19 = arith.addf %16, %18 : vector<256x768xf32>
    %c0_17 = arith.constant 0 : index
    %c0_18 = arith.constant 0 : index
    %20 = vector.load %arg8[%c0_17, %c0_18] : memref<256x768xf32, #tpu.memory_space<vmem>>, vector<256x768xf32>
    tpu.vector_store %arg8[%c0_17, %c0_18], %19 {strides = array<i32>} : memref<256x768xf32, #tpu.memory_space<vmem>>, vector<256x768xf32>,
    return
  }
  func.func @transform_0(%arg0: i32) -> (i32, i32) {
    %c0_i32 = arith.constant 0 : i32
    %c0_i32_0 = arith.constant 0 : i32
    return %arg0, %c0_i32 : i32, i32
  }
  func.func @transform_1(%arg0: i32) -> (i32, i32) {
    %c0_i32 = arith.constant 0 : i32
    %c0_i32_0 = arith.constant 0 : i32
    %c0_i32_1 = arith.constant 0 : i32
    return %c0_i32, %c0_i32_0 : i32, i32
  }
  func.func @transform_2(%arg0: i32) -> (i32, i32) {
    %c0_i32 = arith.constant 0 : i32
    %c0_i32_0 = arith.constant 0 : i32
    %c0_i32_1 = arith.constant 0 : i32
    return %c0_i32, %c0_i32_0 : i32, i32
  }
  func.func @transform_3(%arg0: i32) -> (i32, i32) {
    %c0_i32 = arith.constant 0 : i32
    %c0_i32_0 = arith.constant 0 : i32
    %c0_i32_1 = arith.constant 0 : i32
    return %c0_i32, %c0_i32_0 : i32, i32
  }
  func.func @transform_4(%arg0: i32) -> (i32, i32) {
    %c0_i32 = arith.constant 0 : i32
    %c0_i32_0 = arith.constant 0 : i32
    %c0_i32_1 = arith.constant 0 : i32
    return %c0_i32, %c0_i32_0 : i32, i32
  }
  func.func @transform_5(%arg0: i32) -> (i32, i32) {
    %c0_i32 = arith.constant 0 : i32
    %c0_i32_0 = arith.constant 0 : i32
    %c0_i32_1 = arith.constant 0 : i32
    return %c0_i32, %c0_i32_0 : i32, i32
  }
  func.func @transform_6(%arg0: i32) -> (i32, i32) {
    %c0_i32 = arith.constant 0 : i32
    %c0_i32_0 = arith.constant 0 : i32
    %c0_i32_1 = arith.constant 0 : i32
    return %c0_i32, %c0_i32_0 : i32, i32
  }
  func.func @transform_7(%arg0: i32) -> (i32, i32) {
    %c0_i32 = arith.constant 0 : i32
    %c0_i32_0 = arith.constant 0 : i32
    return %arg0, %c0_i32 : i32, i32
  }
}

</mosaic_0001>

<llo_original>
// kernel: gripper_decoder_forward.1
$region0: #{gripper_decoder_forward.1}
  #allocation0 [shape = 'u32[]', space=smem, size = 0x4, offset = 0x4, fixed_abs, tag = 'smem constant byte address 0x4 - core index']
  #allocation1 [shape = 'u32[144,128]{1,0:T(1,128)}', space=vmem, size = 0x12000, scoped, tag = 'internal scratch']
  %s0 = inlined_call_operand.vmem [shape: f32[512,8], index: 0, kind: input, shape index: {}]
  %s1 = inlined_call_operand.hbm [shape: f32[8,128], index: 1, kind: input, shape index: {}]
  %s2 = inlined_call_operand.hbm [shape: f32[1,128], index: 2, kind: input, shape index: {}]
  %s3 = inlined_call_operand.hbm [shape: f32[128,256], index: 3, kind: input, shape index: {}]
  %s4 = inlined_call_operand.hbm [shape: f32[1,256], index: 4, kind: input, shape index: {}]
  %s5 = inlined_call_operand.hbm [shape: f32[256,768], index: 5, kind: input, shape index: {}]
  %s6 = inlined_call_operand.hbm [shape: f32[1,768], index: 6, kind: input, shape index: {}]
  %s7 = inlined_call_operand.vmem [shape: f32[512,768], index: 7, kind: output, shape index: {}]
  %s8 = sld [smem:[#allocation0]]
  $region85: #{gripper_decoder_forward.1} parent=0
    _
  %s10 = ssub.s32 1, %s8
  %s11 = scalar_select 0, %s10, %s8
  $region1: #{gripper_decoder_forward.1} parent=0
    #allocation2 [shape = 'u8[4096]{0}', space=vmem, size = 0x1000, scoped, tag = 'input window, operand 1, single buffered']
    #allocation3 [shape = 's32[2]{0}', space=sflag, size = 0x8, scoped, tag = 'scoped memory for gripper_decoder_forward.1']
    #allocation4 [shape = 'u8[512]{0}', space=vmem, size = 0x400, scoped, tag = 'input window, operand 2, single buffered']
    #allocation5 [shape = 's32[1]{0}', space=sflag, size = 0x4, scoped, tag = 'scoped memory for gripper_decoder_forward.1']
    #allocation6 [shape = 'u8[131072]{0}', space=vmem, size = 0x20000, scoped, tag = 'input window, operand 3, single buffered']
    #allocation7 [shape = 'u8[1024]{0}', space=vmem, size = 0x400, scoped, tag = 'input window, operand 4, single buffered']
    #allocation8 [shape = 's32[1]{0}', space=sflag, size = 0x4, scoped, tag = 'scoped memory for gripper_decoder_forward.1']
    #allocation9 [shape = 'u8[786432]{0}', space=vmem, size = 0xc0000, scoped, tag = 'input window, operand 5, single buffered']
    #allocation10 [shape = 'u8[3072]{0}', space=vmem, size = 0xc00, scoped, tag = 'input window, operand 6, single buffered']
    #allocation11 [shape = 's32[1]{0}', space=sflag, size = 0x4, scoped, tag = 'scoped memory for gripper_decoder_forward.1']
    %12 = vsyncpa [#allocation3], 0
    %13 = vsyncpa [#allocation5], 0
    %14 = vsyncpa [#allocation8], 0
    %15 = vsyncpa [#allocation11], 0
    loop: start=0, step=1, limit=4
    $region2: #{gripper_decoder_forward.1} parent=1 // loop_pre_header
      _
    $region3: #{gripper_decoder_forward.1} parent=1 // loop_header
      %s17 = sphi 0, %s21
      %p18 = scmp.ge.s32.totalorder %s17, 4
      %s27 = sphi 0, %s29
      %s30 = sphi 0, %s27
      %s31 = sphi 0, %s30
      %s47 = sphi 0, %s31
      %s51 = sphi 0, %s51
      %s53 = sphi 0, %s51
      %s54 = sphi 0, %s53
      %s68 = sphi 0, %s54
      %s72 = sphi 0, %s72
      %s74 = sphi 0, %s72
      %s75 = sphi 0, %s74
      %s89 = sphi 0, %s75
      %s93 = sphi 0, %s93
      %s95 = sphi 0, %s93
      %s96 = sphi 0, %s95
      %s110 = sphi 0, %s96
      %s114 = sphi 0, %s114
      %s116 = sphi 0, %s114
      %s117 = sphi 0, %s116
      %s131 = sphi 0, %s117
      %s135 = sphi 0, %s135
      %s137 = sphi 0, %s135
      %s138 = sphi 0, %s137
      %s152 = sphi 0, %s138
      %s156 = sphi 0, %s156
      %s158 = sphi 0, %s156
      %s159 = sphi 0, %s158
      %s173 = sphi 0, %s159
      %s179 = sphi 0, %s181
      %s182 = sphi 0, %s179
      %s183 = sphi 0, %s182
      %s199 = sphi 0, %s183
    $region4: #{gripper_decoder_forward.1} parent=1 // loop_header_branch
      %20 = sbr.rel (%p18) target = $region8
    $region5: #{gripper_decoder_forward.1} parent=1 // loop_body
      %s22 = ssub.s32 %s17, 1
      %s23 = ssub.s32 %s17, 2
      %s24 = sadd.s32 %s17, 1
      %s25 = ssub.s32 %s17, %s24
      %p26 = scmp.eq.s32.totalorder %s25, 0
      %s28 = sadd.s32 %s27, 1
      %s29 = scalar_select %p26, %s27, %s28
      %p32 = pneg %p26
      %p33 = scmp.eq.s32.totalorder %s17, 1
      %p34 = por %p32, %p33
      %p35 = scmp.ne.s32.totalorder %s27, %s30
      %p36 = scmp.eq.s32.totalorder %s17, 0
      %p37 = por %p35, %p36
      %p38 = scmp.ne.s32.totalorder %s27, %s30
      %p39 = scmp.eq.s32.totalorder %s22, 1
      %p40 = por %p38, %p39
      %p41 = scmp.ne.s32.totalorder %s30, %s31
      %p42 = scmp.eq.s32.totalorder %s22, 0
      %p43 = por %p41, %p42
      %p44 = scmp.ne.s32.totalorder %s30, %s31
      %p45 = scmp.eq.s32.totalorder %s23, 1
      %p46 = por %p44, %p45
      %p48 = scmp.ne.s32.totalorder %s31, %s47
      %p49 = scmp.eq.s32.totalorder %s23, 0
      %p50 = por %p48, %p49
      %s52 = sadd.s32 %s51, 1
      %p55 = scmp.eq.s32.totalorder %s17, 1
      %p56 = scmp.ne.s32.totalorder %s51, %s53
      %p57 = scmp.eq.s32.totalorder %s17, 0
      %p58 = por %p56, %p57
      %p59 = scmp.ne.s32.totalorder %s51, %s53
      %p60 = scmp.eq.s32.totalorder %s22, 1
      %p61 = por %p59, %p60
      %p62 = scmp.ne.s32.totalorder %s53, %s54
      %p63 = scmp.eq.s32.totalorder %s22, 0
      %p64 = por %p62, %p63
      %p65 = scmp.ne.s32.totalorder %s53, %s54
      %p66 = scmp.eq.s32.totalorder %s23, 1
      %p67 = por %p65, %p66
      %p69 = scmp.ne.s32.totalorder %s54, %s68
      %p70 = scmp.eq.s32.totalorder %s23, 0
      %p71 = por %p69, %p70
      %s73 = sadd.s32 %s72, 1
      %p76 = scmp.eq.s32.totalorder %s17, 1
      %p77 = scmp.ne.s32.totalorder %s72, %s74
      %p78 = scmp.eq.s32.totalorder %s17, 0
      %p79 = por %p77, %p78
      %p80 = scmp.ne.s32.totalorder %s72, %s74
      %p81 = scmp.eq.s32.totalorder %s22, 1
      %p82 = por %p80, %p81
      %p83 = scmp.ne.s32.totalorder %s74, %s75
      %p84 = scmp.eq.s32.totalorder %s22, 0
      %p85 = por %p83, %p84
      %p86 = scmp.ne.s32.totalorder %s74, %s75
      %p87 = scmp.eq.s32.totalorder %s23, 1
      %p88 = por %p86, %p87
      %p90 = scmp.ne.s32.totalorder %s75, %s89
      %p91 = scmp.eq.s32.totalorder %s23, 0
      %p92 = por %p90, %p91
      %s94 = sadd.s32 %s93, 1
      %p97 = scmp.eq.s32.totalorder %s17, 1
      %p98 = scmp.ne.s32.totalorder %s93, %s95
      %p99 = scmp.eq.s32.totalorder %s17, 0
      %p100 = por %p98, %p99
      %p101 = scmp.ne.s32.totalorder %s93, %s95
      %p102 = scmp.eq.s32.totalorder %s22, 1
      %p103 = por %p101, %p102
      %p104 = scmp.ne.s32.totalorder %s95, %s96
      %p105 = scmp.eq.s32.totalorder %s22, 0
      %p106 = por %p104, %p105
      %p107 = scmp.ne.s32.totalorder %s95, %s96
      %p108 = scmp.eq.s32.totalorder %s23, 1
      %p109 = por %p107, %p108
      %p111 = scmp.ne.s32.totalorder %s96, %s110
      %p112 = scmp.eq.s32.totalorder %s23, 0
      %p113 = por %p111, %p112
      %s115 = sadd.s32 %s114, 1
      %p118 = scmp.eq.s32.totalorder %s17, 1
      %p119 = scmp.ne.s32.totalorder %s114, %s116
      %p120 = scmp.eq.s32.totalorder %s17, 0
      %p121 = por %p119, %p120
      %p122 = scmp.ne.s32.totalorder %s114, %s116
      %p123 = scmp.eq.s32.totalorder %s22, 1
      %p124 = por %p122, %p123
      %p125 = scmp.ne.s32.totalorder %s116, %s117
      %p126 = scmp.eq.s32.totalorder %s22, 0
      %p127 = por %p125, %p126
      %p128 = scmp.ne.s32.totalorder %s116, %s117
      %p129 = scmp.eq.s32.totalorder %s23, 1
      %p130 = por %p128, %p129
      %p132 = scmp.ne.s32.totalorder %s117, %s131
      %p133 = scmp.eq.s32.totalorder %s23, 0
      %p134 = por %p132, %p133
      %s136 = sadd.s32 %s135, 1
      %p139 = scmp.eq.s32.totalorder %s17, 1
      %p140 = scmp.ne.s32.totalorder %s135, %s137
      %p141 = scmp.eq.s32.totalorder %s17, 0
      %p142 = por %p140, %p141
      %p143 = scmp.ne.s32.totalorder %s135, %s137
      %p144 = scmp.eq.s32.totalorder %s22, 1
      %p145 = por %p143, %p144
      %p146 = scmp.ne.s32.totalorder %s137, %s138
      %p147 = scmp.eq.s32.totalorder %s22, 0
      %p148 = por %p146, %p147
      %p149 = scmp.ne.s32.totalorder %s137, %s138
      %p150 = scmp.eq.s32.totalorder %s23, 1
      %p151 = por %p149, %p150
      %p153 = scmp.ne.s32.totalorder %s138, %s152
      %p154 = scmp.eq.s32.totalorder %s23, 0
      %p155 = por %p153, %p154
      %s157 = sadd.s32 %s156, 1
      %p160 = scmp.eq.s32.totalorder %s17, 1
      %p161 = scmp.ne.s32.totalorder %s156, %s158
      %p162 = scmp.eq.s32.totalorder %s17, 0
      %p163 = por %p161, %p162
      %p164 = scmp.ne.s32.totalorder %s156, %s158
      %p165 = scmp.eq.s32.totalorder %s22, 1
      %p166 = por %p164, %p165
      %p167 = scmp.ne.s32.totalorder %s158, %s159
      %p168 = scmp.eq.s32.totalorder %s22, 0
      %p169 = por %p167, %p168
      %p170 = scmp.ne.s32.totalorder %s158, %s159
      %p171 = scmp.eq.s32.totalorder %s23, 1
      %p172 = por %p170, %p171
      %p174 = scmp.ne.s32.totalorder %s159, %s173
      %p175 = scmp.eq.s32.totalorder %s23, 0
      %p176 = por %p174, %p175
      %s177 = ssub.s32 %s17, %s24
      %p178 = scmp.eq.s32.totalorder %s177, 0
      %s180 = sadd.s32 %s179, 1
      %s181 = scalar_select %p178, %s179, %s180
      %p184 = pneg %p178
      %p185 = scmp.eq.s32.totalorder %s17, 1
      %p186 = por %p184, %p185
      %p187 = scmp.ne.s32.totalorder %s179, %s182
      %p188 = scmp.eq.s32.totalorder %s17, 0
      %p189 = por %p187, %p188
      %p190 = scmp.ne.s32.totalorder %s179, %s182
      %p191 = scmp.eq.s32.totalorder %s22, 1
      %p192 = por %p190, %p191
      %p193 = scmp.ne.s32.totalorder %s182, %s183
      %p194 = scmp.eq.s32.totalorder %s22, 0
      %p195 = por %p193, %p194
      %p196 = scmp.ne.s32.totalorder %s182, %s183
      %p197 = scmp.eq.s32.totalorder %s23, 1
      %p198 = por %p196, %p197
      %p200 = scmp.ne.s32.totalorder %s183, %s199
      %p201 = scmp.eq.s32.totalorder %s23, 0
      %p202 = por %p200, %p201
      %p203 = scmp.le.s32.totalorder 1, %s17
      %p204 = scmp.lt.s32.totalorder %s17, 3
      %p205 = pnand %p203, %p204
      %p206 = pneg %p205
      // Predicated region
      $region9: #{gripper_decoder_forward.1} parent=5 // pred_check
        _
      $region10: #{gripper_decoder_forward.1} parent=5 // pred_check_branch
        %208 = sbr.rel (%p205) target = $region12
      $region11: #{gripper_decoder_forward.1} parent=5 // pred_region
        %s209 = ssub.s32 %s17, 1
        // Predicated region
        $region13: #{gripper_decoder_forward.1} parent=11 // pred_check
          %p210 = pneg %p64
        $region14: #{gripper_decoder_forward.1} parent=11 // pred_check_branch
          %212 = sbr.rel (%p210) target = $region16
        $region15: #{gripper_decoder_forward.1} parent=11 // pred_region
          %s214 = ssub.s32 128, 128
          %215 = vsyncadd [#allocation3], %s214
          %s217 = sshll.u32 [#allocation2], 4
          %s218 = int_to_ptr.vmem [resolvable:$true] %s217
          %220 = dma.hbm_to_vmem [thread:$0]  %s1, 128, %s218, [#allocation3]
        $region16: #{gripper_decoder_forward.1} parent=11 // pred_fallthru
          _
        // Predicated region
        $region17: #{gripper_decoder_forward.1} parent=11 // pred_check
          %p221 = pneg %p85
        $region18: #{gripper_decoder_forward.1} parent=11 // pred_check_branch
          %223 = sbr.rel (%p221) target = $region20
        $region19: #{gripper_decoder_forward.1} parent=11 // pred_region
          %s225 = ssub.s32 16, 16
          %226 = vsyncadd [#allocation5], %s225
          %s228 = sshll.u32 [#allocation4], 4
          %s229 = int_to_ptr.vmem [resolvable:$true] %s228
          %231 = dma.hbm_to_vmem [thread:$0]  %s2, 16, %s229, [#allocation5]
        $region20: #{gripper_decoder_forward.1} parent=11 // pred_fallthru
          _
        // Predicated region
        $region21: #{gripper_decoder_forward.1} parent=11 // pred_check
          %p232 = pneg %p106
        $region22: #{gripper_decoder_forward.1} parent=11 // pred_check_branch
          %234 = sbr.rel (%p232) target = $region24
        $region23: #{gripper_decoder_forward.1} parent=11 // pred_region
          %s236 = ssub.s32 4096, 4096
          %237 = vsyncadd [#allocation5], %s236
          %s238 = sshll.u32 [#allocation6], 4
          %s239 = int_to_ptr.vmem [resolvable:$true] %s238
          %244 = dma.hbm_to_vmem [thread:$0]  %s3, 4096, %s239, [#allocation5], 256, 256, 16
        $region24: #{gripper_decoder_forward.1} parent=11 // pred_fallthru
          _
        // Predicated region
        $region25: #{gripper_decoder_forward.1} parent=11 // pred_check
          %p245 = pneg %p127
        $region26: #{gripper_decoder_forward.1} parent=11 // pred_check_branch
          %247 = sbr.rel (%p245) target = $region28
        $region27: #{gripper_decoder_forward.1} parent=11 // pred_region
          %s249 = ssub.s32 32, 32
          %250 = vsyncadd [#allocation8], %s249
          %s252 = sshll.u32 [#allocation7], 4
          %s253 = int_to_ptr.vmem [resolvable:$true] %s252
          %255 = dma.hbm_to_vmem [thread:$0]  %s4, 32, %s253, [#allocation8]
        $region28: #{gripper_decoder_forward.1} parent=11 // pred_fallthru
          _
        // Predicated region
        $region29: #{gripper_decoder_forward.1} parent=11 // pred_check
          %p256 = pneg %p148
        $region30: #{gripper_decoder_forward.1} parent=11 // pred_check_branch
          %258 = sbr.rel (%p256) target = $region32
        $region31: #{gripper_decoder_forward.1} parent=11 // pred_region
          %s260 = ssub.s32 24576, 24576
          %261 = vsyncadd [#allocation8], %s260
          %s262 = sshll.u32 [#allocation9], 4
          %s263 = int_to_ptr.vmem [resolvable:$true] %s262
          %268 = dma.hbm_to_vmem [thread:$0]  %s5, 24576, %s263, [#allocation8], 768, 768, 48
        $region32: #{gripper_decoder_forward.1} parent=11 // pred_fallthru
          _
        // Predicated region
        $region33: #{gripper_decoder_forward.1} parent=11 // pred_check
          %p269 = pneg %p169
        $region34: #{gripper_decoder_forward.1} parent=11 // pred_check_branch
          %271 = sbr.rel (%p269) target = $region36
        $region35: #{gripper_decoder_forward.1} parent=11 // pred_region
          %s273 = ssub.s32 96, 96
          %274 = vsyncadd [#allocation11], %s273
          %s276 = sshll.u32 [#allocation10], 4
          %s277 = int_to_ptr.vmem [resolvable:$true] %s276
          %279 = dma.hbm_to_vmem [thread:$0]  %s6, 96, %s277, [#allocation11]
        $region36: #{gripper_decoder_forward.1} parent=11 // pred_fallthru
          _
      $region12: #{gripper_decoder_forward.1} parent=5 // pred_fallthru
        _
      %p280 = scmp.lt.s32.totalorder %s17, 2
      // Predicated region
      $region37: #{gripper_decoder_forward.1} parent=5 // pred_check
        %p281 = pneg %p280
      $region38: #{gripper_decoder_forward.1} parent=5 // pred_check_branch
        %283 = sbr.rel (%p281) target = $region40
      $region39: #{gripper_decoder_forward.1} parent=5 // pred_region
        // Predicated region
        $region41: #{gripper_decoder_forward.1} parent=39 // pred_check
          %p284 = pneg %p37
        $region42: #{gripper_decoder_forward.1} parent=39 // pred_check_branch
          %286 = sbr.rel (%p284) target = $region44
        $region43: #{gripper_decoder_forward.1} parent=39 // pred_region
          %s287 = smul.u32 32, %s17
          %p288 = scmp.lt.s32.totalorder %s287, 63
          %s289 = scalar_select %p288, %s287, 63
          %s290 = smul.addr %s289, 8
          %s291 = scalar_lea.vmem %s0, %s290
          %s292 = smul.u32 32, %s17
        $region44: #{gripper_decoder_forward.1} parent=39 // pred_fallthru
          _
      $region40: #{gripper_decoder_forward.1} parent=5 // pred_fallthru
        _
      %p293 = scmp.le.s32.totalorder 1, %s17
      %p294 = scmp.lt.s32.totalorder %s17, 3
      %p295 = pnand %p293, %p294
      %p296 = pneg %p295
      // Predicated region
      $region45: #{gripper_decoder_forward.1} parent=5 // pred_check
        _
      $region46: #{gripper_decoder_forward.1} parent=5 // pred_check_branch
        %298 = sbr.rel (%p295) target = $region48
      $region47: #{gripper_decoder_forward.1} parent=5 // pred_region
        %s299 = ssub.s32 %s17, 1
        // Predicated region
        $region49: #{gripper_decoder_forward.1} parent=47 // pred_check
          %p300 = pneg %p64
        $region50: #{gripper_decoder_forward.1} parent=47 // pred_check_branch
          %302 = sbr.rel (%p300) target = $region52
        $region51: #{gripper_decoder_forward.1} parent=47 // pred_region
          %303 = dma.done [#allocation3], 128
        $region52: #{gripper_decoder_forward.1} parent=47 // pred_fallthru
          _
        // Predicated region
        $region53: #{gripper_decoder_forward.1} parent=47 // pred_check
          %p304 = pneg %p85
        $region54: #{gripper_decoder_forward.1} parent=47 // pred_check_branch
          %306 = sbr.rel (%p304) target = $region56
        $region55: #{gripper_decoder_forward.1} parent=47 // pred_region
          %307 = dma.done [#allocation5], 16
        $region56: #{gripper_decoder_forward.1} parent=47 // pred_fallthru
          _
        // Predicated region
        $region57: #{gripper_decoder_forward.1} parent=47 // pred_check
          %p308 = pneg %p106
        $region58: #{gripper_decoder_forward.1} parent=47 // pred_check_branch
          %310 = sbr.rel (%p308) target = $region60
        $region59: #{gripper_decoder_forward.1} parent=47 // pred_region
          %311 = dma.done [#allocation5], 4096
        $region60: #{gripper_decoder_forward.1} parent=47 // pred_fallthru
          _
        // Predicated region
        $region61: #{gripper_decoder_forward.1} parent=47 // pred_check
          %p312 = pneg %p127
        $region62: #{gripper_decoder_forward.1} parent=47 // pred_check_branch
          %314 = sbr.rel (%p312) target = $region64
        $region63: #{gripper_decoder_forward.1} parent=47 // pred_region
          %315 = dma.done [#allocation8], 32
        $region64: #{gripper_decoder_forward.1} parent=47 // pred_fallthru
          _
        // Predicated region
        $region65: #{gripper_decoder_forward.1} parent=47 // pred_check
          %p316 = pneg %p148
        $region66: #{gripper_decoder_forward.1} parent=47 // pred_check_branch
          %318 = sbr.rel (%p316) target = $region68
        $region67: #{gripper_decoder_forward.1} parent=47 // pred_region
          %319 = dma.done [#allocation8], 24576
        $region68: #{gripper_decoder_forward.1} parent=47 // pred_fallthru
          _
        // Predicated region
        $region69: #{gripper_decoder_forward.1} parent=47 // pred_check
          %p320 = pneg %p169
        $region70: #{gripper_decoder_forward.1} parent=47 // pred_check_branch
          %322 = sbr.rel (%p320) target = $region72
        $region71: #{gripper_decoder_forward.1} parent=47 // pred_region
          %323 = dma.done [#allocation11], 96
        $region72: #{gripper_decoder_forward.1} parent=47 // pred_fallthru
          _
        %s324 = smul.u32 32, %s22
        %p325 = scmp.lt.s32.totalorder %s324, 63
        %s326 = scalar_select %p325, %s324, 63
        %s327 = smul.addr %s326, 8
        %s328 = scalar_lea.vmem %s0, %s327
        %p329 = pneg %p43
        %p330 = pneg %p40
        %p331 = pneg %p64
        %p332 = pneg %p61
        %p333 = pneg %p85
        %p334 = pneg %p82
        %p335 = pneg %p106
        %p336 = pneg %p103
        %p337 = pneg %p127
        %p338 = pneg %p124
        %p339 = pneg %p148
        %p340 = pneg %p145
        %p341 = pneg %p169
        %p342 = pneg %p166
        %p343 = pneg %p195
        %p344 = pneg %p192
        %s345 = smul.u32 32, %s22
        %p346 = scmp.lt.s32.totalorder %s345, 63
        %s347 = scalar_select %p346, %s345, 63
        %s348 = smul.addr %s347, 6
        %s349 = smul.addr %s348, 8
        %s350 = scalar_lea.vmem %s7, %s349
        %s351 = smul.u32 32, %s22
        %p352 = scmp.lt.s32.totalorder %s351, 63
        %s353 = scalar_select %p352, %s351, 63
        %s354 = smul.addr %s353, 8
        %s355 = scalar_lea.vmem %s0, %s354
        %s356 = smul.u32 32, %s22
        %s357 = smul.u32 32, %s22
        %p358 = scmp.lt.s32.totalorder %s357, 63
        %s359 = scalar_select %p358, %s357, 63
        %s360 = smul.addr %s359, 6
        %s361 = smul.addr %s360, 8
        %s362 = scalar_lea.vmem %s7, %s361
        %s363 = smul.u32 32, %s22
        %v364 = vld [vmem:[%s355] sm:$0xff]
        %v365 = vld [vmem:[%s355 + $0x8] sm:$0xff]
        %v366 = vld [vmem:[%s355 + $0x10] sm:$0xff]
        %v367 = vld [vmem:[%s355 + $0x18] sm:$0xff]
        %v368 = vld [vmem:[%s355 + $0x20] sm:$0xff]
        %v369 = vld [vmem:[%s355 + $0x28] sm:$0xff]
        %v370 = vld [vmem:[%s355 + $0x30] sm:$0xff]
        %v371 = vld [vmem:[%s355 + $0x38] sm:$0xff]
        %v372 = vld [vmem:[%s355 + $0x40] sm:$0xff]
        %v373 = vld [vmem:[%s355 + $0x48] sm:$0xff]
        %v374 = vld [vmem:[%s355 + $0x50] sm:$0xff]
        %v375 = vld [vmem:[%s355 + $0x58] sm:$0xff]
        %v376 = vld [vmem:[%s355 + $0x60] sm:$0xff]
        %v377 = vld [vmem:[%s355 + $0x68] sm:$0xff]
        %v378 = vld [vmem:[%s355 + $0x70] sm:$0xff]
        %v379 = vld [vmem:[%s355 + $0x78] sm:$0xff]
        %v380 = vld [vmem:[%s355 + $0x80] sm:$0xff]
        %v381 = vld [vmem:[%s355 + $0x88] sm:$0xff]
        %v382 = vld [vmem:[%s355 + $0x90] sm:$0xff]
        %v383 = vld [vmem:[%s355 + $0x98] sm:$0xff]
        %v384 = vld [vmem:[%s355 + $0xa0] sm:$0xff]
        %v385 = vld [vmem:[%s355 + $0xa8] sm:$0xff]
        %v386 = vld [vmem:[%s355 + $0xb0] sm:$0xff]
        %v387 = vld [vmem:[%s355 + $0xb8] sm:$0xff]
        %v388 = vld [vmem:[%s355 + $0xc0] sm:$0xff]
        %v389 = vld [vmem:[%s355 + $0xc8] sm:$0xff]
        %v390 = vld [vmem:[%s355 + $0xd0] sm:$0xff]
        %v391 = vld [vmem:[%s355 + $0xd8] sm:$0xff]
        %v392 = vld [vmem:[%s355 + $0xe0] sm:$0xff]
        %v393 = vld [vmem:[%s355 + $0xe8] sm:$0xff]
        %v394 = vld [vmem:[%s355 + $0xf0] sm:$0xff]
        %v395 = vld [vmem:[%s355 + $0xf8] sm:$0xff]
        %v396 = vld [vmem:[#allocation2] sm:$0xff]
        %v397 = vld [vmem:[#allocation4] sm:$0x1]
        %v399 = vlaneseq
        %v400 = vshrl.u32 %v399, 7
        %v401 = vsub.s32 0, %v400
        %v402 = vrot.slane %v397, %v401
        %vm404 = vcmask 64512
        %v406 = vsel %vm404, %v364, 0
        %v409 = vsel %vm404, %v365, 0
        %v412 = vsel %vm404, %v366, 0
        %v415 = vsel %vm404, %v367, 0
        %v418 = vsel %vm404, %v368, 0
        %v421 = vsel %vm404, %v369, 0
        %v424 = vsel %vm404, %v370, 0
        %v427 = vsel %vm404, %v371, 0
        %v430 = vsel %vm404, %v372, 0
        %v433 = vsel %vm404, %v373, 0
        %v436 = vsel %vm404, %v374, 0
        %v439 = vsel %vm404, %v375, 0
        %v442 = vsel %vm404, %v376, 0
        %v445 = vsel %vm404, %v377, 0
        %v448 = vsel %vm404, %v378, 0
        %v451 = vsel %vm404, %v379, 0
        %v454 = vsel %vm404, %v380, 0
        %v457 = vsel %vm404, %v381, 0
        %v460 = vsel %vm404, %v382, 0
        %v463 = vsel %vm404, %v383, 0
        %v466 = vsel %vm404, %v384, 0
        %v469 = vsel %vm404, %v385, 0
        %v472 = vsel %vm404, %v386, 0
        %v475 = vsel %vm404, %v387, 0
        %v478 = vsel %vm404, %v388, 0
        %v481 = vsel %vm404, %v389, 0
        %v484 = vsel %vm404, %v390, 0
        %v487 = vsel %vm404, %v391, 0
        %v490 = vsel %vm404, %v392, 0
        %v493 = vsel %vm404, %v393, 0
        %v496 = vsel %vm404, %v394, 0
        %v499 = vsel %vm404, %v395, 0
        %501 = vmatprep.subr.mxu0 0.0
        %502 = vmatpush1.msra.mxu0 0.0
        %503 = vmatprep.subr.mxu0 0.0
        %504 = vmatpush1.msra.mxu0 0.0
        %505 = vmatprep.subr.mxu0 0.0
        %506 = vmatpush1.msra.mxu0 0.0
        %507 = vmatprep.subr.mxu0 0.0
        %508 = vmatpush1.msra.mxu0 0.0
        %509 = vmatprep.subr.mxu0 0.0
        %510 = vmatpush1.msra.mxu0 0.0
        %511 = vmatprep.subr.mxu0 0.0
        %512 = vmatpush1.msra.mxu0 0.0
        %513 = vmatprep.subr.mxu0 0.0
        %514 = vmatpush1.msra.mxu0 0.0
        %515 = vmatprep.subr.mxu0 0.0
        %516 = vmatpush1.msra.mxu0 0.0
        %517 = vmatprep.subr.mxu0 0.0
        %518 = vmatpush1.msra.mxu0 0.0
        %519 = vmatprep.subr.mxu0 0.0
        %520 = vmatpush1.msra.mxu0 0.0
        %521 = vmatprep.subr.mxu0 0.0
        %522 = vmatpush1.msra.mxu0 0.0
        %523 = vmatprep.subr.mxu0 0.0
        %524 = vmatpush1.msra.mxu0 0.0
        %525 = vmatprep.subr.mxu0 0.0
        %526 = vmatpush1.msra.mxu0 0.0
        %527 = vmatprep.subr.mxu0 0.0
        %528 = vmatpush1.msra.mxu0 0.0
        %529 = vmatprep.subr.mxu0 0.0
        %530 = vmatpush1.msra.mxu0 0.0
        %531 = vmatprep.subr.mxu0 0.0
        %532 = vmatpush1.msra.mxu0 %v396
        %533 = vmatprep.subr.mxu0 0.0
        %534 = vmatpush2.msra.mxu0 0.0
        %535 = vmatprep.subr.mxu0 0.0
        %536 = vmatpush2.msra.mxu0 0.0
        %537 = vmatprep.subr.mxu0 0.0
        %538 = vmatpush2.msra.mxu0 0.0
        %539 = vmatprep.subr.mxu0 0.0
        %540 = vmatpush2.msra.mxu0 0.0
        %541 = vmatprep.subr.mxu0 0.0
        %542 = vmatpush2.msra.mxu0 0.0
        %543 = vmatprep.subr.mxu0 0.0
        %544 = vmatpush2.msra.mxu0 0.0
        %545 = vmatprep.subr.mxu0 0.0
        %546 = vmatpush2.msra.mxu0 0.0
        %547 = vmatprep.subr.mxu0 0.0
        %548 = vmatpush2.msra.mxu0 0.0
        %549 = vmatprep.subr.mxu0 0.0
        %550 = vmatpush2.msra.mxu0 0.0
        %551 = vmatprep.subr.mxu0 0.0
        %552 = vmatpush2.msra.mxu0 0.0
        %553 = vmatprep.subr.mxu0 0.0
        %554 = vmatpush2.msra.mxu0 0.0
        %555 = vmatprep.subr.mxu0 0.0
        %556 = vmatpush2.msra.mxu0 0.0
        %557 = vmatprep.subr.mxu0 0.0
        %558 = vmatpush2.msra.mxu0 0.0
        %559 = vmatprep.subr.mxu0 0.0
        %560 = vmatpush2.msra.mxu0 0.0
        %561 = vmatprep.subr.mxu0 0.0
        %562 = vmatpush2.msra.mxu0 0.0
        %563 = vmatprep.subr.mxu0 0.0
        %564 = vmatpush2.msra.mxu0 0.0
        %565 = vmatprep.mubr.f32.mxu0 0.0
        %566 = vmatmul.mubr.f32.gmra.mxu0 %v406
        %v567 = vpop.f32.mrf.mxu0
        %v568 = vadd.f32 %v402, %v567
        %v569 = vpop.f32.mrf.mxu0
        %570 = vmatprep.mubr.f32.mxu0 0.0
        %571 = vmatmul.mubr.f32.gmra.mxu0 %v409
        %v572 = vpop.f32.mrf.mxu0
        %v573 = vadd.f32 %v402, %v572
        %v574 = vpop.f32.mrf.mxu0
        %575 = vmatprep.mubr.f32.mxu0 0.0
        %576 = vmatmul.mubr.f32.gmra.mxu0 %v412
        %v577 = vpop.f32.mrf.mxu0
        %v578 = vadd.f32 %v402, %v577
        %v579 = vpop.f32.mrf.mxu0
        %580 = vmatprep.mubr.f32.mxu0 0.0
        %581 = vmatmul.mubr.f32.gmra.mxu0 %v415
        %v582 = vpop.f32.mrf.mxu0
        %v583 = vadd.f32 %v402, %v582
        %v584 = vpop.f32.mrf.mxu0
        %585 = vmatprep.mubr.f32.mxu0 0.0
        %586 = vmatmul.mubr.f32.gmra.mxu0 %v418
        %v587 = vpop.f32.mrf.mxu0
        %v588 = vadd.f32 %v402, %v587
        %v589 = vpop.f32.mrf.mxu0
        %590 = vmatprep.mubr.f32.mxu0 0.0
        %591 = vmatmul.mubr.f32.gmra.mxu0 %v421
        %v592 = vpop.f32.mrf.mxu0
        %v593 = vadd.f32 %v402, %v592
        %v594 = vpop.f32.mrf.mxu0
        %595 = vmatprep.mubr.f32.mxu0 0.0
        %596 = vmatmul.mubr.f32.gmra.mxu0 %v424
        %v597 = vpop.f32.mrf.mxu0
        %v598 = vadd.f32 %v402, %v597
        %v599 = vpop.f32.mrf.mxu0
        %600 = vmatprep.mubr.f32.mxu0 0.0
        %601 = vmatmul.mubr.f32.gmra.mxu0 %v427
        %v602 = vpop.f32.mrf.mxu0
        %v603 = vadd.f32 %v402, %v602
        %v604 = vpop.f32.mrf.mxu0
        %605 = vmatprep.mubr.f32.mxu0 0.0
        %606 = vmatmul.mubr.f32.gmra.mxu0 %v430
        %v607 = vpop.f32.mrf.mxu0
        %v608 = vadd.f32 %v402, %v607
        %v609 = vpop.f32.mrf.mxu0
        %610 = vmatprep.mubr.f32.mxu0 0.0
        %611 = vmatmul.mubr.f32.gmra.mxu0 %v433
        %v612 = vpop.f32.mrf.mxu0
        %v613 = vadd.f32 %v402, %v612
        %v614 = vpop.f32.mrf.mxu0
        %615 = vmatprep.mubr.f32.mxu0 0.0
        %616 = vmatmul.mubr.f32.gmra.mxu0 %v436
        %v617 = vpop.f32.mrf.mxu0
        %v618 = vadd.f32 %v402, %v617
        %v619 = vpop.f32.mrf.mxu0
        %620 = vmatprep.mubr.f32.mxu0 0.0
        %621 = vmatmul.mubr.f32.gmra.mxu0 %v439
        %v622 = vpop.f32.mrf.mxu0
        %v623 = vadd.f32 %v402, %v622
        %v624 = vpop.f32.mrf.mxu0
        %625 = vmatprep.mubr.f32.mxu0 0.0
        %626 = vmatmul.mubr.f32.gmra.mxu0 %v442
        %v627 = vpop.f32.mrf.mxu0
        %v628 = vadd.f32 %v402, %v627
        %v629 = vpop.f32.mrf.mxu0
        %630 = vmatprep.mubr.f32.mxu0 0.0
        %631 = vmatmul.mubr.f32.gmra.mxu0 %v445
        %v632 = vpop.f32.mrf.mxu0
        %v633 = vadd.f32 %v402, %v632
        %v634 = vpop.f32.mrf.mxu0
        %635 = vmatprep.mubr.f32.mxu0 0.0
        %636 = vmatmul.mubr.f32.gmra.mxu0 %v448
        %v637 = vpop.f32.mrf.mxu0
        %v638 = vadd.f32 %v402, %v637
        %v639 = vpop.f32.mrf.mxu0
        %640 = vmatprep.mubr.f32.mxu0 0.0
        %641 = vmatmul.mubr.f32.gmra.mxu0 %v451
        %v642 = vpop.f32.mrf.mxu0
        %v643 = vadd.f32 %v402, %v642
        %v644 = vpop.f32.mrf.mxu0
        %645 = vmatprep.mubr.f32.mxu0 0.0
        %646 = vmatmul.mubr.f32.gmra.mxu0 %v454
        %v647 = vpop.f32.mrf.mxu0
        %v648 = vadd.f32 %v402, %v647
        %v649 = vpop.f32.mrf.mxu0
        %650 = vmatprep.mubr.f32.mxu0 0.0
        %651 = vmatmul.mubr.f32.gmra.mxu0 %v457
        %v652 = vpop.f32.mrf.mxu0
        %v653 = vadd.f32 %v402, %v652
        %v654 = vpop.f32.mrf.mxu0
        %655 = vmatprep.mubr.f32.mxu0 0.0
        %656 = vmatmul.mubr.f32.gmra.mxu0 %v460
        %v657 = vpop.f32.mrf.mxu0
        %v658 = vadd.f32 %v402, %v657
        %v659 = vpop.f32.mrf.mxu0
        %660 = vmatprep.mubr.f32.mxu0 0.0
        %661 = vmatmul.mubr.f32.gmra.mxu0 %v463
        %v662 = vpop.f32.mrf.mxu0
        %v663 = vadd.f32 %v402, %v662
        %v664 = vpop.f32.mrf.mxu0
        %665 = vmatprep.mubr.f32.mxu0 0.0
        %666 = vmatmul.mubr.f32.gmra.mxu0 %v466
        %v667 = vpop.f32.mrf.mxu0
        %v668 = vadd.f32 %v402, %v667
        %v669 = vpop.f32.mrf.mxu0
        %670 = vmatprep.mubr.f32.mxu0 0.0
        %671 = vmatmul.mubr.f32.gmra.mxu0 %v469
        %v672 = vpop.f32.mrf.mxu0
        %v673 = vadd.f32 %v402, %v672
        %v674 = vpop.f32.mrf.mxu0
        %675 = vmatprep.mubr.f32.mxu0 0.0
        %676 = vmatmul.mubr.f32.gmra.mxu0 %v472
        %v677 = vpop.f32.mrf.mxu0
        %v678 = vadd.f32 %v402, %v677
        %v679 = vpop.f32.mrf.mxu0
        %680 = vmatprep.mubr.f32.mxu0 0.0
        %681 = vmatmul.mubr.f32.gmra.mxu0 %v475
        %v682 = vpop.f32.mrf.mxu0
        %v683 = vadd.f32 %v402, %v682
        %v684 = vpop.f32.mrf.mxu0
        %685 = vmatprep.mubr.f32.mxu0 0.0
        %686 = vmatmul.mubr.f32.gmra.mxu0 %v478
        %v687 = vpop.f32.mrf.mxu0
        %v688 = vadd.f32 %v402, %v687
        %v689 = vpop.f32.mrf.mxu0
        %690 = vmatprep.mubr.f32.mxu0 0.0
        %691 = vmatmul.mubr.f32.gmra.mxu0 %v481
        %v692 = vpop.f32.mrf.mxu0
        %v693 = vadd.f32 %v402, %v692
        %v694 = vpop.f32.mrf.mxu0
        %695 = vmatprep.mubr.f32.mxu0 0.0
        %696 = vmatmul.mubr.f32.gmra.mxu0 %v484
        %v697 = vpop.f32.mrf.mxu0
        %v698 = vadd.f32 %v402, %v697
        %v699 = vpop.f32.mrf.mxu0
        %700 = vmatprep.mubr.f32.mxu0 0.0
        %701 = vmatmul.mubr.f32.gmra.mxu0 %v487
        %v702 = vpop.f32.mrf.mxu0
        %v703 = vadd.f32 %v402, %v702
        %v704 = vpop.f32.mrf.mxu0
        %705 = vmatprep.mubr.f32.mxu0 0.0
        %706 = vmatmul.mubr.f32.gmra.mxu0 %v490
        %v707 = vpop.f32.mrf.mxu0
        %v708 = vadd.f32 %v402, %v707
        %v709 = vpop.f32.mrf.mxu0
        %710 = vmatprep.mubr.f32.mxu0 0.0
        %711 = vmatmul.mubr.f32.gmra.mxu0 %v493
        %v712 = vpop.f32.mrf.mxu0
        %v713 = vadd.f32 %v402, %v712
        %v714 = vpop.f32.mrf.mxu0
        %715 = vmatprep.mubr.f32.mxu0 0.0
        %716 = vmatmul.mubr.f32.gmra.mxu0 %v496
        %v717 = vpop.f32.mrf.mxu0
        %v718 = vadd.f32 %v402, %v717
        %v719 = vpop.f32.mrf.mxu0
        %720 = vmatprep.mubr.f32.mxu0 0.0
        %721 = vmatmul.mubr.f32.gmra.mxu0 %v499
        %v722 = vpop.f32.mrf.mxu0
        %v723 = vadd.f32 %v402, %v722
        %v724 = vpop.f32.mrf.mxu0
        %725 = vdwg.mxu0
        %v726 = vmax.f32 %v568, 0.0
        %v727 = vmax.f32 %v573, 0.0
        %v728 = vmax.f32 %v578, 0.0
        %v729 = vmax.f32 %v583, 0.0
        %v730 = vmax.f32 %v588, 0.0
        %v731 = vmax.f32 %v593, 0.0
        %v732 = vmax.f32 %v598, 0.0
        %v733 = vmax.f32 %v603, 0.0
        %v734 = vmax.f32 %v608, 0.0
        %v735 = vmax.f32 %v613, 0.0
        %v736 = vmax.f32 %v618, 0.0
        %v737 = vmax.f32 %v623, 0.0
        %v738 = vmax.f32 %v628, 0.0
        %v739 = vmax.f32 %v633, 0.0
        %v740 = vmax.f32 %v638, 0.0
        %v741 = vmax.f32 %v643, 0.0
        %v742 = vmax.f32 %v648, 0.0
        %v743 = vmax.f32 %v653, 0.0
        %v744 = vmax.f32 %v658, 0.0
        %v745 = vmax.f32 %v663, 0.0
        %v746 = vmax.f32 %v668, 0.0
        %v747 = vmax.f32 %v673, 0.0
        %v748 = vmax.f32 %v678, 0.0
        %v749 = vmax.f32 %v683, 0.0
        %v750 = vmax.f32 %v688, 0.0
        %v751 = vmax.f32 %v693, 0.0
        %v752 = vmax.f32 %v698, 0.0
        %v753 = vmax.f32 %v703, 0.0
        %v754 = vmax.f32 %v708, 0.0
        %v755 = vmax.f32 %v713, 0.0
        %v756 = vmax.f32 %v718, 0.0
        %v757 = vmax.f32 %v723, 0.0
        %v758 = vld [vmem:[#allocation6] sm:$0xff]
        %v759 = vld [vmem:[#allocation6 + $0x8] sm:$0xff]
        %v760 = vld [vmem:[#allocation6 + $0x10] sm:$0xff]
        %v761 = vld [vmem:[#allocation6 + $0x18] sm:$0xff]
        %v762 = vld [vmem:[#allocation6 + $0x20] sm:$0xff]
        %v763 = vld [vmem:[#allocation6 + $0x28] sm:$0xff]
        %v764 = vld [vmem:[#allocation6 + $0x30] sm:$0xff]
        %v765 = vld [vmem:[#allocation6 + $0x38] sm:$0xff]
        %v766 = vld [vmem:[#allocation6 + $0x40] sm:$0xff]
        %v767 = vld [vmem:[#allocation6 + $0x48] sm:$0xff]
        %v768 = vld [vmem:[#allocation6 + $0x50] sm:$0xff]
        %v769 = vld [vmem:[#allocation6 + $0x58] sm:$0xff]
        %v770 = vld [vmem:[#allocation6 + $0x60] sm:$0xff]
        %v771 = vld [vmem:[#allocation6 + $0x68] sm:$0xff]
        %v772 = vld [vmem:[#allocation6 + $0x70] sm:$0xff]
        %v773 = vld [vmem:[#allocation6 + $0x78] sm:$0xff]
        %v774 = vld [vmem:[#allocation6 + $0x80] sm:$0xff]
        %v775 = vld [vmem:[#allocation6 + $0x88] sm:$0xff]
        %v776 = vld [vmem:[#allocation6 + $0x90] sm:$0xff]
        %v777 = vld [vmem:[#allocation6 + $0x98] sm:$0xff]
        %v778 = vld [vmem:[#allocation6 + $0xa0] sm:$0xff]
        %v779 = vld [vmem:[#allocation6 + $0xa8] sm:$0xff]
        %v780 = vld [vmem:[#allocation6 + $0xb0] sm:$0xff]
        %v781 = vld [vmem:[#allocation6 + $0xb8] sm:$0xff]
        %v782 = vld [vmem:[#allocation6 + $0xc0] sm:$0xff]
        %v783 = vld [vmem:[#allocation6 + $0xc8] sm:$0xff]
        %v784 = vld [vmem:[#allocation6 + $0xd0] sm:$0xff]
        %v785 = vld [vmem:[#allocation6 + $0xd8] sm:$0xff]
        %v786 = vld [vmem:[#allocation6 + $0xe0] sm:$0xff]
        %v787 = vld [vmem:[#allocation6 + $0xe8] sm:$0xff]
        %v788 = vld [vmem:[#allocation6 + $0xf0] sm:$0xff]
        %v789 = vld [vmem:[#allocation6 + $0xf8] sm:$0xff]
        %v790 = vld [vmem:[#allocation7] sm:$0x3]
        %v792 = vlaneseq
        %v793 = vshrl.u32 %v792, 7
        %v794 = vsub.s32 0, %v793
        %v795 = vrot.slane %v790, %v794
        %v796 = vlaneseq
        %v797 = vshrl.u32 %v796, 7
        %v798 = vsub.s32 1, %v797
        %v799 = vrot.slane %v790, %v798
        %802 = vmatprep.subr.mxu0 %v789
        %803 = vmatpush1.msra.mxu0 %v788
        %804 = vmatprep.subr.mxu0 %v787
        %805 = vmatpush1.msra.mxu0 %v786
        %806 = vmatprep.subr.mxu0 %v785
        %807 = vmatpush1.msra.mxu0 %v784
        %808 = vmatprep.subr.mxu0 %v783
        %809 = vmatpush1.msra.mxu0 %v782
        %810 = vmatprep.subr.mxu0 %v781
        %811 = vmatpush1.msra.mxu0 %v780
        %812 = vmatprep.subr.mxu0 %v779
        %813 = vmatpush1.msra.mxu0 %v778
        %814 = vmatprep.subr.mxu0 %v777
        %815 = vmatpush1.msra.mxu0 %v776
        %816 = vmatprep.subr.mxu0 %v775
        %817 = vmatpush1.msra.mxu0 %v774
        %818 = vmatprep.subr.mxu0 %v773
        %819 = vmatpush1.msra.mxu0 %v772
        %820 = vmatprep.subr.mxu0 %v771
        %821 = vmatpush1.msra.mxu0 %v770
        %822 = vmatprep.subr.mxu0 %v769
        %823 = vmatpush1.msra.mxu0 %v768
        %824 = vmatprep.subr.mxu0 %v767
        %825 = vmatpush1.msra.mxu0 %v766
        %826 = vmatprep.subr.mxu0 %v765
        %827 = vmatpush1.msra.mxu0 %v764
        %828 = vmatprep.subr.mxu0 %v763
        %829 = vmatpush1.msra.mxu0 %v762
        %830 = vmatprep.subr.mxu0 %v761
        %831 = vmatpush1.msra.mxu0 %v760
        %832 = vmatprep.subr.mxu0 %v759
        %833 = vmatpush1.msra.mxu0 %v758
        %834 = vmatprep.subr.mxu0 0.0
        %835 = vmatpush2.msra.mxu0 0.0
        %836 = vmatprep.subr.mxu0 0.0
        %837 = vmatpush2.msra.mxu0 0.0
        %838 = vmatprep.subr.mxu0 0.0
        %839 = vmatpush2.msra.mxu0 0.0
        %840 = vmatprep.subr.mxu0 0.0
        %841 = vmatpush2.msra.mxu0 0.0
        %842 = vmatprep.subr.mxu0 0.0
        %843 = vmatpush2.msra.mxu0 0.0
        %844 = vmatprep.subr.mxu0 0.0
        %845 = vmatpush2.msra.mxu0 0.0
        %846 = vmatprep.subr.mxu0 0.0
        %847 = vmatpush2.msra.mxu0 0.0
        %848 = vmatprep.subr.mxu0 0.0
        %849 = vmatpush2.msra.mxu0 0.0
        %850 = vmatprep.subr.mxu0 0.0
        %851 = vmatpush2.msra.mxu0 0.0
        %852 = vmatprep.subr.mxu0 0.0
        %853 = vmatpush2.msra.mxu0 0.0
        %854 = vmatprep.subr.mxu0 0.0
        %855 = vmatpush2.msra.mxu0 0.0
        %856 = vmatprep.subr.mxu0 0.0
        %857 = vmatpush2.msra.mxu0 0.0
        %858 = vmatprep.subr.mxu0 0.0
        %859 = vmatpush2.msra.mxu0 0.0
        %860 = vmatprep.subr.mxu0 0.0
        %861 = vmatpush2.msra.mxu0 0.0
        %862 = vmatprep.subr.mxu0 0.0
        %863 = vmatpush2.msra.mxu0 0.0
        %864 = vmatprep.subr.mxu0 0.0
        %865 = vmatpush2.msra.mxu0 0.0
        %866 = vmatprep.mubr.f32.mxu0 0.0
        %867 = vmatmul.mubr.f32.gmra.mxu0 %v726
        %v868 = vpop.f32.mrf.mxu0
        %v869 = vadd.f32 %v795, %v868
        %v870 = vpop.f32.mrf.mxu0
        %v871 = vadd.f32 %v799, %v870
        %872 = vmatprep.mubr.f32.mxu0 0.0
        %873 = vmatmul.mubr.f32.gmra.mxu0 %v727
        %v874 = vpop.f32.mrf.mxu0
        %v875 = vadd.f32 %v795, %v874
        %v876 = vpop.f32.mrf.mxu0
        %v877 = vadd.f32 %v799, %v876
        %878 = vmatprep.mubr.f32.mxu0 0.0
        %879 = vmatmul.mubr.f32.gmra.mxu0 %v728
        %v880 = vpop.f32.mrf.mxu0
        %v881 = vadd.f32 %v795, %v880
        %v882 = vpop.f32.mrf.mxu0
        %v883 = vadd.f32 %v799, %v882
        %884 = vmatprep.mubr.f32.mxu0 0.0
        %885 = vmatmul.mubr.f32.gmra.mxu0 %v729
        %v886 = vpop.f32.mrf.mxu0
        %v887 = vadd.f32 %v795, %v886
        %v888 = vpop.f32.mrf.mxu0
        %v889 = vadd.f32 %v799, %v888
        %890 = vmatprep.mubr.f32.mxu0 0.0
        %891 = vmatmul.mubr.f32.gmra.mxu0 %v730
        %v892 = vpop.f32.mrf.mxu0
        %v893 = vadd.f32 %v795, %v892
        %v894 = vpop.f32.mrf.mxu0
        %v895 = vadd.f32 %v799, %v894
        %896 = vmatprep.mubr.f32.mxu0 0.0
        %897 = vmatmul.mubr.f32.gmra.mxu0 %v731
        %v898 = vpop.f32.mrf.mxu0
        %v899 = vadd.f32 %v795, %v898
        %v900 = vpop.f32.mrf.mxu0
        %v901 = vadd.f32 %v799, %v900
        %902 = vmatprep.mubr.f32.mxu0 0.0
        %903 = vmatmul.mubr.f32.gmra.mxu0 %v732
        %v904 = vpop.f32.mrf.mxu0
        %v905 = vadd.f32 %v795, %v904
        %v906 = vpop.f32.mrf.mxu0
        %v907 = vadd.f32 %v799, %v906
        %908 = vmatprep.mubr.f32.mxu0 0.0
        %909 = vmatmul.mubr.f32.gmra.mxu0 %v733
        %v910 = vpop.f32.mrf.mxu0
        %v911 = vadd.f32 %v795, %v910
        %v912 = vpop.f32.mrf.mxu0
        %v913 = vadd.f32 %v799, %v912
        %914 = vmatprep.mubr.f32.mxu0 0.0
        %915 = vmatmul.mubr.f32.gmra.mxu0 %v734
        %v916 = vpop.f32.mrf.mxu0
        %v917 = vadd.f32 %v795, %v916
        %v918 = vpop.f32.mrf.mxu0
        %v919 = vadd.f32 %v799, %v918
        %920 = vmatprep.mubr.f32.mxu0 0.0
        %921 = vmatmul.mubr.f32.gmra.mxu0 %v735
        %v922 = vpop.f32.mrf.mxu0
        %v923 = vadd.f32 %v795, %v922
        %v924 = vpop.f32.mrf.mxu0
        %v925 = vadd.f32 %v799, %v924
        %926 = vmatprep.mubr.f32.mxu0 0.0
        %927 = vmatmul.mubr.f32.gmra.mxu0 %v736
        %v928 = vpop.f32.mrf.mxu0
        %v929 = vadd.f32 %v795, %v928
        %v930 = vpop.f32.mrf.mxu0
        %v931 = vadd.f32 %v799, %v930
        %932 = vmatprep.mubr.f32.mxu0 0.0
        %933 = vmatmul.mubr.f32.gmra.mxu0 %v737
        %v934 = vpop.f32.mrf.mxu0
        %v935 = vadd.f32 %v795, %v934
        %v936 = vpop.f32.mrf.mxu0
        %v937 = vadd.f32 %v799, %v936
        %938 = vmatprep.mubr.f32.mxu0 0.0
        %939 = vmatmul.mubr.f32.gmra.mxu0 %v738
        %v940 = vpop.f32.mrf.mxu0
        %v941 = vadd.f32 %v795, %v940
        %v942 = vpop.f32.mrf.mxu0
        %v943 = vadd.f32 %v799, %v942
        %944 = vmatprep.mubr.f32.mxu0 0.0
        %945 = vmatmul.mubr.f32.gmra.mxu0 %v739
        %v946 = vpop.f32.mrf.mxu0
        %v947 = vadd.f32 %v795, %v946
        %v948 = vpop.f32.mrf.mxu0
        %v949 = vadd.f32 %v799, %v948
        %950 = vmatprep.mubr.f32.mxu0 0.0
        %951 = vmatmul.mubr.f32.gmra.mxu0 %v740
        %v952 = vpop.f32.mrf.mxu0
        %v953 = vadd.f32 %v795, %v952
        %v954 = vpop.f32.mrf.mxu0
        %v955 = vadd.f32 %v799, %v954
        %956 = vmatprep.mubr.f32.mxu0 0.0
        %957 = vmatmul.mubr.f32.gmra.mxu0 %v741
        %v958 = vpop.f32.mrf.mxu0
        %v959 = vadd.f32 %v795, %v958
        %v960 = vpop.f32.mrf.mxu0
        %v961 = vadd.f32 %v799, %v960
        %962 = vmatprep.mubr.f32.mxu0 0.0
        %963 = vmatmul.mubr.f32.gmra.mxu0 %v742
        %v964 = vpop.f32.mrf.mxu0
        %v965 = vadd.f32 %v795, %v964
        %v966 = vpop.f32.mrf.mxu0
        %v967 = vadd.f32 %v799, %v966
        %968 = vmatprep.mubr.f32.mxu0 0.0
        %969 = vmatmul.mubr.f32.gmra.mxu0 %v743
        %v970 = vpop.f32.mrf.mxu0
        %v971 = vadd.f32 %v795, %v970
        %v972 = vpop.f32.mrf.mxu0
        %v973 = vadd.f32 %v799, %v972
        %974 = vmatprep.mubr.f32.mxu0 0.0
        %975 = vmatmul.mubr.f32.gmra.mxu0 %v744
        %v976 = vpop.f32.mrf.mxu0
        %v977 = vadd.f32 %v795, %v976
        %v978 = vpop.f32.mrf.mxu0
        %v979 = vadd.f32 %v799, %v978
        %980 = vmatprep.mubr.f32.mxu0 0.0
        %981 = vmatmul.mubr.f32.gmra.mxu0 %v745
        %v982 = vpop.f32.mrf.mxu0
        %v983 = vadd.f32 %v795, %v982
        %v984 = vpop.f32.mrf.mxu0
        %v985 = vadd.f32 %v799, %v984
        %986 = vmatprep.mubr.f32.mxu0 0.0
        %987 = vmatmul.mubr.f32.gmra.mxu0 %v746
        %v988 = vpop.f32.mrf.mxu0
        %v989 = vadd.f32 %v795, %v988
        %v990 = vpop.f32.mrf.mxu0
        %v991 = vadd.f32 %v799, %v990
        %992 = vmatprep.mubr.f32.mxu0 0.0
        %993 = vmatmul.mubr.f32.gmra.mxu0 %v747
        %v994 = vpop.f32.mrf.mxu0
        %v995 = vadd.f32 %v795, %v994
        %v996 = vpop.f32.mrf.mxu0
        %v997 = vadd.f32 %v799, %v996
        %998 = vmatprep.mubr.f32.mxu0 0.0
        %999 = vmatmul.mubr.f32.gmra.mxu0 %v748
        %v1000 = vpop.f32.mrf.mxu0
        %v1001 = vadd.f32 %v795, %v1000
        %v1002 = vpop.f32.mrf.mxu0
        %v1003 = vadd.f32 %v799, %v1002
        %1004 = vmatprep.mubr.f32.mxu0 0.0
        %1005 = vmatmul.mubr.f32.gmra.mxu0 %v749
        %v1006 = vpop.f32.mrf.mxu0
        %v1007 = vadd.f32 %v795, %v1006
        %v1008 = vpop.f32.mrf.mxu0
        %v1009 = vadd.f32 %v799, %v1008
        %1010 = vmatprep.mubr.f32.mxu0 0.0
        %1011 = vmatmul.mubr.f32.gmra.mxu0 %v750
        %v1012 = vpop.f32.mrf.mxu0
        %v1013 = vadd.f32 %v795, %v1012
        %v1014 = vpop.f32.mrf.mxu0
        %v1015 = vadd.f32 %v799, %v1014
        %1016 = vmatprep.mubr.f32.mxu0 0.0
        %1017 = vmatmul.mubr.f32.gmra.mxu0 %v751
        %v1018 = vpop.f32.mrf.mxu0
        %v1019 = vadd.f32 %v795, %v1018
        %v1020 = vpop.f32.mrf.mxu0
        %v1021 = vadd.f32 %v799, %v1020
        %1022 = vmatprep.mubr.f32.mxu0 0.0
        %1023 = vmatmul.mubr.f32.gmra.mxu0 %v752
        %v1024 = vpop.f32.mrf.mxu0
        %v1025 = vadd.f32 %v795, %v1024
        %v1026 = vpop.f32.mrf.mxu0
        %v1027 = vadd.f32 %v799, %v1026
        %1028 = vmatprep.mubr.f32.mxu0 0.0
        %1029 = vmatmul.mubr.f32.gmra.mxu0 %v753
        %v1030 = vpop.f32.mrf.mxu0
        %v1031 = vadd.f32 %v795, %v1030
        %v1032 = vpop.f32.mrf.mxu0
        %v1033 = vadd.f32 %v799, %v1032
        %1034 = vmatprep.mubr.f32.mxu0 0.0
        %1035 = vmatmul.mubr.f32.gmra.mxu0 %v754
        %v1036 = vpop.f32.mrf.mxu0
        %v1037 = vadd.f32 %v795, %v1036
        %v1038 = vpop.f32.mrf.mxu0
        %v1039 = vadd.f32 %v799, %v1038
        %1040 = vmatprep.mubr.f32.mxu0 0.0
        %1041 = vmatmul.mubr.f32.gmra.mxu0 %v755
        %v1042 = vpop.f32.mrf.mxu0
        %v1043 = vadd.f32 %v795, %v1042
        %v1044 = vpop.f32.mrf.mxu0
        %v1045 = vadd.f32 %v799, %v1044
        %1046 = vmatprep.mubr.f32.mxu0 0.0
        %1047 = vmatmul.mubr.f32.gmra.mxu0 %v756
        %v1048 = vpop.f32.mrf.mxu0
        %v1049 = vadd.f32 %v795, %v1048
        %v1050 = vpop.f32.mrf.mxu0
        %v1051 = vadd.f32 %v799, %v1050
        %1052 = vmatprep.mubr.f32.mxu0 0.0
        %1053 = vmatmul.mubr.f32.gmra.mxu0 %v757
        %v1054 = vpop.f32.mrf.mxu0
        %v1055 = vadd.f32 %v795, %v1054
        %v1056 = vpop.f32.mrf.mxu0
        %v1057 = vadd.f32 %v799, %v1056
        %1058 = vdwg.mxu0
        %v1059 = vmax.f32 %v869, 0.0
        %v1060 = vmax.f32 %v871, 0.0
        %v1061 = vmax.f32 %v875, 0.0
        %v1062 = vmax.f32 %v877, 0.0
        %v1063 = vmax.f32 %v881, 0.0
        %v1064 = vmax.f32 %v883, 0.0
        %v1065 = vmax.f32 %v887, 0.0
        %v1066 = vmax.f32 %v889, 0.0
        %v1067 = vmax.f32 %v893, 0.0
        %v1068 = vmax.f32 %v895, 0.0
        %v1069 = vmax.f32 %v899, 0.0
        %v1070 = vmax.f32 %v901, 0.0
        %v1071 = vmax.f32 %v905, 0.0
        %v1072 = vmax.f32 %v907, 0.0
        %v1073 = vmax.f32 %v911, 0.0
        %v1074 = vmax.f32 %v913, 0.0
        %v1075 = vmax.f32 %v917, 0.0
        %v1076 = vmax.f32 %v919, 0.0
        %v1077 = vmax.f32 %v923, 0.0
        %v1078 = vmax.f32 %v925, 0.0
        %v1079 = vmax.f32 %v929, 0.0
        %v1080 = vmax.f32 %v931, 0.0
        %v1081 = vmax.f32 %v935, 0.0
        %v1082 = vmax.f32 %v937, 0.0
        %v1083 = vmax.f32 %v941, 0.0
        %v1084 = vmax.f32 %v943, 0.0
        %v1085 = vmax.f32 %v947, 0.0
        %v1086 = vmax.f32 %v949, 0.0
        %v1087 = vmax.f32 %v953, 0.0
        %v1088 = vmax.f32 %v955, 0.0
        %v1089 = vmax.f32 %v959, 0.0
        %v1090 = vmax.f32 %v961, 0.0
        %v1091 = vmax.f32 %v965, 0.0
        %v1092 = vmax.f32 %v967, 0.0
        %v1093 = vmax.f32 %v971, 0.0
        %v1094 = vmax.f32 %v973, 0.0
        %v1095 = vmax.f32 %v977, 0.0
        %v1096 = vmax.f32 %v979, 0.0
        %v1097 = vmax.f32 %v983, 0.0
        %v1098 = vmax.f32 %v985, 0.0
        %v1099 = vmax.f32 %v989, 0.0
        %v1100 = vmax.f32 %v991, 0.0
        %v1101 = vmax.f32 %v995, 0.0
        %v1102 = vmax.f32 %v997, 0.0
        %v1103 = vmax.f32 %v1001, 0.0
        %v1104 = vmax.f32 %v1003, 0.0
        %v1105 = vmax.f32 %v1007, 0.0
        %v1106 = vmax.f32 %v1009, 0.0
        %v1107 = vmax.f32 %v1013, 0.0
        %v1108 = vmax.f32 %v1015, 0.0
        %v1109 = vmax.f32 %v1019, 0.0
        %v1110 = vmax.f32 %v1021, 0.0
        %v1111 = vmax.f32 %v1025, 0.0
        %v1112 = vmax.f32 %v1027, 0.0
        %v1113 = vmax.f32 %v1031, 0.0
        %v1114 = vmax.f32 %v1033, 0.0
        %v1115 = vmax.f32 %v1037, 0.0
        %v1116 = vmax.f32 %v1039, 0.0
        %v1117 = vmax.f32 %v1043, 0.0
        %v1118 = vmax.f32 %v1045, 0.0
        %v1119 = vmax.f32 %v1049, 0.0
        %v1120 = vmax.f32 %v1051, 0.0
        %v1121 = vmax.f32 %v1055, 0.0
        %v1122 = vmax.f32 %v1057, 0.0
        %v1123 = vld [vmem:[#allocation9] sm:$0xff]
        %v1124 = vld [vmem:[#allocation9 + $0x8] sm:$0xff]
        %v1125 = vld [vmem:[#allocation9 + $0x10] sm:$0xff]
        %v1126 = vld [vmem:[#allocation9 + $0x18] sm:$0xff]
        %v1127 = vld [vmem:[#allocation9 + $0x20] sm:$0xff]
        %v1128 = vld [vmem:[#allocation9 + $0x28] sm:$0xff]
        %v1129 = vld [vmem:[#allocation9 + $0x30] sm:$0xff]
        %v1130 = vld [vmem:[#allocation9 + $0x38] sm:$0xff]
        %v1131 = vld [vmem:[#allocation9 + $0x40] sm:$0xff]
        %v1132 = vld [vmem:[#allocation9 + $0x48] sm:$0xff]
        %v1133 = vld [vmem:[#allocation9 + $0x50] sm:$0xff]
        %v1134 = vld [vmem:[#allocation9 + $0x58] sm:$0xff]
        %v1135 = vld [vmem:[#allocation9 + $0x60] sm:$0xff]
        %v1136 = vld [vmem:[#allocation9 + $0x68] sm:$0xff]
        %v1137 = vld [vmem:[#allocation9 + $0x70] sm:$0xff]
        %v1138 = vld [vmem:[#allocation9 + $0x78] sm:$0xff]
        %v1139 = vld [vmem:[#allocation9 + $0x80] sm:$0xff]
        %v1140 = vld [vmem:[#allocation9 + $0x88] sm:$0xff]
        %v1141 = vld [vmem:[#allocation9 + $0x90] sm:$0xff]
        %v1142 = vld [vmem:[#allocation9 + $0x98] sm:$0xff]
        %v1143 = vld [vmem:[#allocation9 + $0xa0] sm:$0xff]
        %v1144 = vld [vmem:[#allocation9 + $0xa8] sm:$0xff]
        %v1145 = vld [vmem:[#allocation9 + $0xb0] sm:$0xff]
        %v1146 = vld [vmem:[#allocation9 + $0xb8] sm:$0xff]
        %v1147 = vld [vmem:[#allocation9 + $0xc0] sm:$0xff]
        %v1148 = vld [vmem:[#allocation9 + $0xc8] sm:$0xff]
        %v1149 = vld [vmem:[#allocation9 + $0xd0] sm:$0xff]
        %v1150 = vld [vmem:[#allocation9 + $0xd8] sm:$0xff]
        %v1151 = vld [vmem:[#allocation9 + $0xe0] sm:$0xff]
        %v1152 = vld [vmem:[#allocation9 + $0xe8] sm:$0xff]
        %v1153 = vld [vmem:[#allocation9 + $0xf0] sm:$0xff]
        %v1154 = vld [vmem:[#allocation9 + $0xf8] sm:$0xff]
        %v1155 = vld [vmem:[#allocation9 + $0x100] sm:$0xff]
        %v1156 = vld [vmem:[#allocation9 + $0x108] sm:$0xff]
        %v1157 = vld [vmem:[#allocation9 + $0x110] sm:$0xff]
        %v1158 = vld [vmem:[#allocation9 + $0x118] sm:$0xff]
        %v1159 = vld [vmem:[#allocation9 + $0x120] sm:$0xff]
        %v1160 = vld [vmem:[#allocation9 + $0x128] sm:$0xff]
        %v1161 = vld [vmem:[#allocation9 + $0x130] sm:$0xff]
        %v1162 = vld [vmem:[#allocation9 + $0x138] sm:$0xff]
        %v1163 = vld [vmem:[#allocation9 + $0x140] sm:$0xff]
        %v1164 = vld [vmem:[#allocation9 + $0x148] sm:$0xff]
        %v1165 = vld [vmem:[#allocation9 + $0x150] sm:$0xff]
        %v1166 = vld [vmem:[#allocation9 + $0x158] sm:$0xff]
        %v1167 = vld [vmem:[#allocation9 + $0x160] sm:$0xff]
        %v1168 = vld [vmem:[#allocation9 + $0x168] sm:$0xff]
        %v1169 = vld [vmem:[#allocation9 + $0x170] sm:$0xff]
        %v1170 = vld [vmem:[#allocation9 + $0x178] sm:$0xff]
        %v1171 = vld [vmem:[#allocation9 + $0x180] sm:$0xff]
        %v1172 = vld [vmem:[#allocation9 + $0x188] sm:$0xff]
        %v1173 = vld [vmem:[#allocation9 + $0x190] sm:$0xff]
        %v1174 = vld [vmem:[#allocation9 + $0x198] sm:$0xff]
        %v1175 = vld [vmem:[#allocation9 + $0x1a0] sm:$0xff]
        %v1176 = vld [vmem:[#allocation9 + $0x1a8] sm:$0xff]
        %v1177 = vld [vmem:[#allocation9 + $0x1b0] sm:$0xff]
        %v1178 = vld [vmem:[#allocation9 + $0x1b8] sm:$0xff]
        %v1179 = vld [vmem:[#allocation9 + $0x1c0] sm:$0xff]
        %v1180 = vld [vmem:[#allocation9 + $0x1c8] sm:$0xff]
        %v1181 = vld [vmem:[#allocation9 + $0x1d0] sm:$0xff]
        %v1182 = vld [vmem:[#allocation9 + $0x1d8] sm:$0xff]
        %v1183 = vld [vmem:[#allocation9 + $0x1e0] sm:$0xff]
        %v1184 = vld [vmem:[#allocation9 + $0x1e8] sm:$0xff]
        %v1185 = vld [vmem:[#allocation9 + $0x1f0] sm:$0xff]
        %v1186 = vld [vmem:[#allocation9 + $0x1f8] sm:$0xff]
        %v1187 = vld [vmem:[#allocation9 + $0x200] sm:$0xff]
        %v1188 = vld [vmem:[#allocation9 + $0x208] sm:$0xff]
        %v1189 = vld [vmem:[#allocation9 + $0x210] sm:$0xff]
        %v1190 = vld [vmem:[#allocation9 + $0x218] sm:$0xff]
        %v1191 = vld [vmem:[#allocation9 + $0x220] sm:$0xff]
        %v1192 = vld [vmem:[#allocation9 + $0x228] sm:$0xff]
        %v1193 = vld [vmem:[#allocation9 + $0x230] sm:$0xff]
        %v1194 = vld [vmem:[#allocation9 + $0x238] sm:$0xff]
        %v1195 = vld [vmem:[#allocation9 + $0x240] sm:$0xff]
        %v1196 = vld [vmem:[#allocation9 + $0x248] sm:$0xff]
        %v1197 = vld [vmem:[#allocation9 + $0x250] sm:$0xff]
        %v1198 = vld [vmem:[#allocation9 + $0x258] sm:$0xff]
        %v1199 = vld [vmem:[#allocation9 + $0x260] sm:$0xff]
        %v1200 = vld [vmem:[#allocation9 + $0x268] sm:$0xff]
        %v1201 = vld [vmem:[#allocation9 + $0x270] sm:$0xff]
        %v1202 = vld [vmem:[#allocation9 + $0x278] sm:$0xff]
        %v1203 = vld [vmem:[#allocation9 + $0x280] sm:$0xff]
        %v1204 = vld [vmem:[#allocation9 + $0x288] sm:$0xff]
        %v1205 = vld [vmem:[#allocation9 + $0x290] sm:$0xff]
        %v1206 = vld [vmem:[#allocation9 + $0x298] sm:$0xff]
        %v1207 = vld [vmem:[#allocation9 + $0x2a0] sm:$0xff]
        %v1208 = vld [vmem:[#allocation9 + $0x2a8] sm:$0xff]
        %v1209 = vld [vmem:[#allocation9 + $0x2b0] sm:$0xff]
        %v1210 = vld [vmem:[#allocation9 + $0x2b8] sm:$0xff]
        %v1211 = vld [vmem:[#allocation9 + $0x2c0] sm:$0xff]
        %v1212 = vld [vmem:[#allocation9 + $0x2c8] sm:$0xff]
        %v1213 = vld [vmem:[#allocation9 + $0x2d0] sm:$0xff]
        %v1214 = vld [vmem:[#allocation9 + $0x2d8] sm:$0xff]
        %v1215 = vld [vmem:[#allocation9 + $0x2e0] sm:$0xff]
        %v1216 = vld [vmem:[#allocation9 + $0x2e8] sm:$0xff]
        %v1217 = vld [vmem:[#allocation9 + $0x2f0] sm:$0xff]
        %v1218 = vld [vmem:[#allocation9 + $0x2f8] sm:$0xff]
        %v1219 = vld [vmem:[#allocation9 + $0x300] sm:$0xff]
        %v1220 = vld [vmem:[#allocation9 + $0x308] sm:$0xff]
        %v1221 = vld [vmem:[#allocation9 + $0x310] sm:$0xff]
        %v1222 = vld [vmem:[#allocation9 + $0x318] sm:$0xff]
        %v1223 = vld [vmem:[#allocation9 + $0x320] sm:$0xff]
        %v1224 = vld [vmem:[#allocation9 + $0x328] sm:$0xff]
        %v1225 = vld [vmem:[#allocation9 + $0x330] sm:$0xff]
        %v1226 = vld [vmem:[#allocation9 + $0x338] sm:$0xff]
        %v1227 = vld [vmem:[#allocation9 + $0x340] sm:$0xff]
        %v1228 = vld [vmem:[#allocation9 + $0x348] sm:$0xff]
        %v1229 = vld [vmem:[#allocation9 + $0x350] sm:$0xff]
        %v1230 = vld [vmem:[#allocation9 + $0x358] sm:$0xff]
        %v1231 = vld [vmem:[#allocation9 + $0x360] sm:$0xff]
        %v1232 = vld [vmem:[#allocation9 + $0x368] sm:$0xff]
        %v1233 = vld [vmem:[#allocation9 + $0x370] sm:$0xff]
        %v1234 = vld [vmem:[#allocation9 + $0x378] sm:$0xff]
        %v1235 = vld [vmem:[#allocation9 + $0x380] sm:$0xff]
        %v1236 = vld [vmem:[#allocation9 + $0x388] sm:$0xff]
        %v1237 = vld [vmem:[#allocation9 + $0x390] sm:$0xff]
        %v1238 = vld [vmem:[#allocation9 + $0x398] sm:$0xff]
        %v1239 = vld [vmem:[#allocation9 + $0x3a0] sm:$0xff]
        %v1240 = vld [vmem:[#allocation9 + $0x3a8] sm:$0xff]
        %v1241 = vld [vmem:[#allocation9 + $0x3b0] sm:$0xff]
        %v1242 = vld [vmem:[#allocation9 + $0x3b8] sm:$0xff]
        %v1243 = vld [vmem:[#allocation9 + $0x3c0] sm:$0xff]
        %v1244 = vld [vmem:[#allocation9 + $0x3c8] sm:$0xff]
        %v1245 = vld [vmem:[#allocation9 + $0x3d0] sm:$0xff]
        %v1246 = vld [vmem:[#allocation9 + $0x3d8] sm:$0xff]
        %v1247 = vld [vmem:[#allocation9 + $0x3e0] sm:$0xff]
        %v1248 = vld [vmem:[#allocation9 + $0x3e8] sm:$0xff]
        %v1249 = vld [vmem:[#allocation9 + $0x3f0] sm:$0xff]
        %v1250 = vld [vmem:[#allocation9 + $0x3f8] sm:$0xff]
        %v1251 = vld [vmem:[#allocation9 + $0x400] sm:$0xff]
        %v1252 = vld [vmem:[#allocation9 + $0x408] sm:$0xff]
        %v1253 = vld [vmem:[#allocation9 + $0x410] sm:$0xff]
        %v1254 = vld [vmem:[#allocation9 + $0x418] sm:$0xff]
        %v1255 = vld [vmem:[#allocation9 + $0x420] sm:$0xff]
        %v1256 = vld [vmem:[#allocation9 + $0x428] sm:$0xff]
        %v1257 = vld [vmem:[#allocation9 + $0x430] sm:$0xff]
        %v1258 = vld [vmem:[#allocation9 + $0x438] sm:$0xff]
        %v1259 = vld [vmem:[#allocation9 + $0x440] sm:$0xff]
        %v1260 = vld [vmem:[#allocation9 + $0x448] sm:$0xff]
        %v1261 = vld [vmem:[#allocation9 + $0x450] sm:$0xff]
        %v1262 = vld [vmem:[#allocation9 + $0x458] sm:$0xff]
        %v1263 = vld [vmem:[#allocation9 + $0x460] sm:$0xff]
        %v1264 = vld [vmem:[#allocation9 + $0x468] sm:$0xff]
        %v1265 = vld [vmem:[#allocation9 + $0x470] sm:$0xff]
        %v1266 = vld [vmem:[#allocation9 + $0x478] sm:$0xff]
        %v1267 = vld [vmem:[#allocation9 + $0x480] sm:$0xff]
        %v1268 = vld [vmem:[#allocation9 + $0x488] sm:$0xff]
        %v1269 = vld [vmem:[#allocation9 + $0x490] sm:$0xff]
        %v1270 = vld [vmem:[#allocation9 + $0x498] sm:$0xff]
        %v1271 = vld [vmem:[#allocation9 + $0x4a0] sm:$0xff]
        %v1272 = vld [vmem:[#allocation9 + $0x4a8] sm:$0xff]
        %v1273 = vld [vmem:[#allocation9 + $0x4b0] sm:$0xff]
        %v1274 = vld [vmem:[#allocation9 + $0x4b8] sm:$0xff]
        %v1275 = vld [vmem:[#allocation9 + $0x4c0] sm:$0xff]
        %v1276 = vld [vmem:[#allocation9 + $0x4c8] sm:$0xff]
        %v1277 = vld [vmem:[#allocation9 + $0x4d0] sm:$0xff]
        %v1278 = vld [vmem:[#allocation9 + $0x4d8] sm:$0xff]
        %v1279 = vld [vmem:[#allocation9 + $0x4e0] sm:$0xff]
        %v1280 = vld [vmem:[#allocation9 + $0x4e8] sm:$0xff]
        %v1281 = vld [vmem:[#allocation9 + $0x4f0] sm:$0xff]
        %v1282 = vld [vmem:[#allocation9 + $0x4f8] sm:$0xff]
        %v1283 = vld [vmem:[#allocation9 + $0x500] sm:$0xff]
        %v1284 = vld [vmem:[#allocation9 + $0x508] sm:$0xff]
        %v1285 = vld [vmem:[#allocation9 + $0x510] sm:$0xff]
        %v1286 = vld [vmem:[#allocation9 + $0x518] sm:$0xff]
        %v1287 = vld [vmem:[#allocation9 + $0x520] sm:$0xff]
        %v1288 = vld [vmem:[#allocation9 + $0x528] sm:$0xff]
        %v1289 = vld [vmem:[#allocation9 + $0x530] sm:$0xff]
        %v1290 = vld [vmem:[#allocation9 + $0x538] sm:$0xff]
        %v1291 = vld [vmem:[#allocation9 + $0x540] sm:$0xff]
        %v1292 = vld [vmem:[#allocation9 + $0x548] sm:$0xff]
        %v1293 = vld [vmem:[#allocation9 + $0x550] sm:$0xff]
        %v1294 = vld [vmem:[#allocation9 + $0x558] sm:$0xff]
        %v1295 = vld [vmem:[#allocation9 + $0x560] sm:$0xff]
        %v1296 = vld [vmem:[#allocation9 + $0x568] sm:$0xff]
        %v1297 = vld [vmem:[#allocation9 + $0x570] sm:$0xff]
        %v1298 = vld [vmem:[#allocation9 + $0x578] sm:$0xff]
        %v1299 = vld [vmem:[#allocation9 + $0x580] sm:$0xff]
        %v1300 = vld [vmem:[#allocation9 + $0x588] sm:$0xff]
        %v1301 = vld [vmem:[#allocation9 + $0x590] sm:$0xff]
        %v1302 = vld [vmem:[#allocation9 + $0x598] sm:$0xff]
        %v1303 = vld [vmem:[#allocation9 + $0x5a0] sm:$0xff]
        %v1304 = vld [vmem:[#allocation9 + $0x5a8] sm:$0xff]
        %v1305 = vld [vmem:[#allocation9 + $0x5b0] sm:$0xff]
        %v1306 = vld [vmem:[#allocation9 + $0x5b8] sm:$0xff]
        %v1307 = vld [vmem:[#allocation9 + $0x5c0] sm:$0xff]
        %v1308 = vld [vmem:[#allocation9 + $0x5c8] sm:$0xff]
        %v1309 = vld [vmem:[#allocation9 + $0x5d0] sm:$0xff]
        %v1310 = vld [vmem:[#allocation9 + $0x5d8] sm:$0xff]
        %v1311 = vld [vmem:[#allocation9 + $0x5e0] sm:$0xff]
        %v1312 = vld [vmem:[#allocation9 + $0x5e8] sm:$0xff]
        %v1313 = vld [vmem:[#allocation9 + $0x5f0] sm:$0xff]
        %v1314 = vld [vmem:[#allocation9 + $0x5f8] sm:$0xff]
        %v1315 = vld [vmem:[#allocation10] sm:$0x3f]
        %v1317 = vlaneseq
        %v1318 = vshrl.u32 %v1317, 7
        %v1319 = vsub.s32 0, %v1318
        %v1320 = vrot.slane %v1315, %v1319
        %v1321 = vlaneseq
        %v1322 = vshrl.u32 %v1321, 7
        %v1323 = vsub.s32 1, %v1322
        %v1324 = vrot.slane %v1315, %v1323
        %v1325 = vlaneseq
        %v1326 = vshrl.u32 %v1325, 7
        %v1327 = vsub.s32 2, %v1326
        %v1328 = vrot.slane %v1315, %v1327
        %v1329 = vlaneseq
        %v1330 = vshrl.u32 %v1329, 7
        %v1331 = vsub.s32 3, %v1330
        %v1332 = vrot.slane %v1315, %v1331
        %v1333 = vlaneseq
        %v1334 = vshrl.u32 %v1333, 7
        %v1335 = vsub.s32 4, %v1334
        %v1336 = vrot.slane %v1315, %v1335
        %v1337 = vlaneseq
        %v1338 = vshrl.u32 %v1337, 7
        %v1339 = vsub.s32 5, %v1338
        %v1340 = vrot.slane %v1315, %v1339
        %1347 = vmatprep.subr.mxu0 %v1214
        %1348 = vmatpush1.msra.mxu0 %v1213
        %1349 = vmatprep.subr.mxu0 %v1208
        %1350 = vmatpush1.msra.mxu0 %v1207
        %1351 = vmatprep.subr.mxu0 %v1202
        %1352 = vmatpush1.msra.mxu0 %v1201
        %1353 = vmatprep.subr.mxu0 %v1196
        %1354 = vmatpush1.msra.mxu0 %v1195
        %1355 = vmatprep.subr.mxu0 %v1190
        %1356 = vmatpush1.msra.mxu0 %v1189
        %1357 = vmatprep.subr.mxu0 %v1184
        %1358 = vmatpush1.msra.mxu0 %v1183
        %1359 = vmatprep.subr.mxu0 %v1178
        %1360 = vmatpush1.msra.mxu0 %v1177
        %1361 = vmatprep.subr.mxu0 %v1172
        %1362 = vmatpush1.msra.mxu0 %v1171
        %1363 = vmatprep.subr.mxu0 %v1166
        %1364 = vmatpush1.msra.mxu0 %v1165
        %1365 = vmatprep.subr.mxu0 %v1160
        %1366 = vmatpush1.msra.mxu0 %v1159
        %1367 = vmatprep.subr.mxu0 %v1154
        %1368 = vmatpush1.msra.mxu0 %v1153
        %1369 = vmatprep.subr.mxu0 %v1148
        %1370 = vmatpush1.msra.mxu0 %v1147
        %1371 = vmatprep.subr.mxu0 %v1142
        %1372 = vmatpush1.msra.mxu0 %v1141
        %1373 = vmatprep.subr.mxu0 %v1136
        %1374 = vmatpush1.msra.mxu0 %v1135
        %1375 = vmatprep.subr.mxu0 %v1130
        %1376 = vmatpush1.msra.mxu0 %v1129
        %1377 = vmatprep.subr.mxu0 %v1124
        %1378 = vmatpush1.msra.mxu0 %v1123
        %1379 = vmatprep.subr.mxu0 %v1310
        %1380 = vmatpush2.msra.mxu0 %v1309
        %1381 = vmatprep.subr.mxu0 %v1304
        %1382 = vmatpush2.msra.mxu0 %v1303
        %1383 = vmatprep.subr.mxu0 %v1298
        %1384 = vmatpush2.msra.mxu0 %v1297
        %1385 = vmatprep.subr.mxu0 %v1292
        %1386 = vmatpush2.msra.mxu0 %v1291
        %1387 = vmatprep.subr.mxu0 %v1286
        %1388 = vmatpush2.msra.mxu0 %v1285
        %1389 = vmatprep.subr.mxu0 %v1280
        %1390 = vmatpush2.msra.mxu0 %v1279
        %1391 = vmatprep.subr.mxu0 %v1274
        %1392 = vmatpush2.msra.mxu0 %v1273
        %1393 = vmatprep.subr.mxu0 %v1268
        %1394 = vmatpush2.msra.mxu0 %v1267
        %1395 = vmatprep.subr.mxu0 %v1262
        %1396 = vmatpush2.msra.mxu0 %v1261
        %1397 = vmatprep.subr.mxu0 %v1256
        %1398 = vmatpush2.msra.mxu0 %v1255
        %1399 = vmatprep.subr.mxu0 %v1250
        %1400 = vmatpush2.msra.mxu0 %v1249
        %1401 = vmatprep.subr.mxu0 %v1244
        %1402 = vmatpush2.msra.mxu0 %v1243
        %1403 = vmatprep.subr.mxu0 %v1238
        %1404 = vmatpush2.msra.mxu0 %v1237
        %1405 = vmatprep.subr.mxu0 %v1232
        %1406 = vmatpush2.msra.mxu0 %v1231
        %1407 = vmatprep.subr.mxu0 %v1226
        %1408 = vmatpush2.msra.mxu0 %v1225
        %1409 = vmatprep.subr.mxu0 %v1220
        %1410 = vmatpush2.msra.mxu0 %v1219
        %1411 = vmatprep.mubr.f32.mxu0 %v1060
        %1412 = vmatmul.mubr.f32.gmra.mxu0 %v1059
        %v1413 = vpop.f32.mrf.mxu0
        %v1414 = vadd.f32 %v1320, %v1413
        %v1415 = vpop.f32.mrf.mxu0
        %v1416 = vadd.f32 %v1324, %v1415
        %1417 = vmatprep.mubr.f32.mxu0 %v1062
        %1418 = vmatmul.mubr.f32.gmra.mxu0 %v1061
        %v1419 = vpop.f32.mrf.mxu0
        %v1420 = vadd.f32 %v1320, %v1419
        %v1421 = vpop.f32.mrf.mxu0
        %v1422 = vadd.f32 %v1324, %v1421
        %1423 = vmatprep.mubr.f32.mxu0 %v1064
        %1424 = vmatmul.mubr.f32.gmra.mxu0 %v1063
        %v1425 = vpop.f32.mrf.mxu0
        %v1426 = vadd.f32 %v1320, %v1425
        %v1427 = vpop.f32.mrf.mxu0
        %v1428 = vadd.f32 %v1324, %v1427
        %1429 = vmatprep.mubr.f32.mxu0 %v1066
        %1430 = vmatmul.mubr.f32.gmra.mxu0 %v1065
        %v1431 = vpop.f32.mrf.mxu0
        %v1432 = vadd.f32 %v1320, %v1431
        %v1433 = vpop.f32.mrf.mxu0
        %v1434 = vadd.f32 %v1324, %v1433
        %1435 = vmatprep.mubr.f32.mxu0 %v1068
        %1436 = vmatmul.mubr.f32.gmra.mxu0 %v1067
        %v1437 = vpop.f32.mrf.mxu0
        %v1438 = vadd.f32 %v1320, %v1437
        %v1439 = vpop.f32.mrf.mxu0
        %v1440 = vadd.f32 %v1324, %v1439
        %1441 = vmatprep.mubr.f32.mxu0 %v1070
        %1442 = vmatmul.mubr.f32.gmra.mxu0 %v1069
        %v1443 = vpop.f32.mrf.mxu0
        %v1444 = vadd.f32 %v1320, %v1443
        %v1445 = vpop.f32.mrf.mxu0
        %v1446 = vadd.f32 %v1324, %v1445
        %1447 = vmatprep.mubr.f32.mxu0 %v1072
        %1448 = vmatmul.mubr.f32.gmra.mxu0 %v1071
        %v1449 = vpop.f32.mrf.mxu0
        %v1450 = vadd.f32 %v1320, %v1449
        %v1451 = vpop.f32.mrf.mxu0
        %v1452 = vadd.f32 %v1324, %v1451
        %1453 = vmatprep.mubr.f32.mxu0 %v1074
        %1454 = vmatmul.mubr.f32.gmra.mxu0 %v1073
        %v1455 = vpop.f32.mrf.mxu0
        %v1456 = vadd.f32 %v1320, %v1455
        %v1457 = vpop.f32.mrf.mxu0
        %v1458 = vadd.f32 %v1324, %v1457
        %1459 = vmatprep.mubr.f32.mxu0 %v1076
        %1460 = vmatmul.mubr.f32.gmra.mxu0 %v1075
        %v1461 = vpop.f32.mrf.mxu0
        %v1462 = vadd.f32 %v1320, %v1461
        %v1463 = vpop.f32.mrf.mxu0
        %v1464 = vadd.f32 %v1324, %v1463
        %1465 = vmatprep.mubr.f32.mxu0 %v1078
        %1466 = vmatmul.mubr.f32.gmra.mxu0 %v1077
        %v1467 = vpop.f32.mrf.mxu0
        %v1468 = vadd.f32 %v1320, %v1467
        %v1469 = vpop.f32.mrf.mxu0
        %v1470 = vadd.f32 %v1324, %v1469
        %1471 = vmatprep.mubr.f32.mxu0 %v1080
        %1472 = vmatmul.mubr.f32.gmra.mxu0 %v1079
        %v1473 = vpop.f32.mrf.mxu0
        %v1474 = vadd.f32 %v1320, %v1473
        %v1475 = vpop.f32.mrf.mxu0
        %v1476 = vadd.f32 %v1324, %v1475
        %1477 = vmatprep.mubr.f32.mxu0 %v1082
        %1478 = vmatmul.mubr.f32.gmra.mxu0 %v1081
        %v1479 = vpop.f32.mrf.mxu0
        %v1480 = vadd.f32 %v1320, %v1479
        %v1481 = vpop.f32.mrf.mxu0
        %v1482 = vadd.f32 %v1324, %v1481
        %1483 = vmatprep.mubr.f32.mxu0 %v1084
        %1484 = vmatmul.mubr.f32.gmra.mxu0 %v1083
        %v1485 = vpop.f32.mrf.mxu0
        %v1486 = vadd.f32 %v1320, %v1485
        %v1487 = vpop.f32.mrf.mxu0
        %v1488 = vadd.f32 %v1324, %v1487
        %1489 = vmatprep.mubr.f32.mxu0 %v1086
        %1490 = vmatmul.mubr.f32.gmra.mxu0 %v1085
        %v1491 = vpop.f32.mrf.mxu0
        %v1492 = vadd.f32 %v1320, %v1491
        %v1493 = vpop.f32.mrf.mxu0
        %v1494 = vadd.f32 %v1324, %v1493
        %1495 = vmatprep.mubr.f32.mxu0 %v1088
        %1496 = vmatmul.mubr.f32.gmra.mxu0 %v1087
        %v1497 = vpop.f32.mrf.mxu0
        %v1498 = vadd.f32 %v1320, %v1497
        %v1499 = vpop.f32.mrf.mxu0
        %v1500 = vadd.f32 %v1324, %v1499
        %1501 = vmatprep.mubr.f32.mxu0 %v1090
        %1502 = vmatmul.mubr.f32.gmra.mxu0 %v1089
        %v1503 = vpop.f32.mrf.mxu0
        %v1504 = vadd.f32 %v1320, %v1503
        %v1505 = vpop.f32.mrf.mxu0
        %v1506 = vadd.f32 %v1324, %v1505
        %1507 = vmatprep.mubr.f32.mxu0 %v1092
        %1508 = vmatmul.mubr.f32.gmra.mxu0 %v1091
        %v1509 = vpop.f32.mrf.mxu0
        %v1510 = vadd.f32 %v1320, %v1509
        %v1511 = vpop.f32.mrf.mxu0
        %v1512 = vadd.f32 %v1324, %v1511
        %1513 = vmatprep.mubr.f32.mxu0 %v1094
        %1514 = vmatmul.mubr.f32.gmra.mxu0 %v1093
        %v1515 = vpop.f32.mrf.mxu0
        %v1516 = vadd.f32 %v1320, %v1515
        %v1517 = vpop.f32.mrf.mxu0
        %v1518 = vadd.f32 %v1324, %v1517
        %1519 = vmatprep.mubr.f32.mxu0 %v1096
        %1520 = vmatmul.mubr.f32.gmra.mxu0 %v1095
        %v1521 = vpop.f32.mrf.mxu0
        %v1522 = vadd.f32 %v1320, %v1521
        %v1523 = vpop.f32.mrf.mxu0
        %v1524 = vadd.f32 %v1324, %v1523
        %1525 = vmatprep.mubr.f32.mxu0 %v1098
        %1526 = vmatmul.mubr.f32.gmra.mxu0 %v1097
        %v1527 = vpop.f32.mrf.mxu0
        %v1528 = vadd.f32 %v1320, %v1527
        %v1529 = vpop.f32.mrf.mxu0
        %v1530 = vadd.f32 %v1324, %v1529
        %1531 = vmatprep.mubr.f32.mxu0 %v1100
        %1532 = vmatmul.mubr.f32.gmra.mxu0 %v1099
        %v1533 = vpop.f32.mrf.mxu0
        %v1534 = vadd.f32 %v1320, %v1533
        %v1535 = vpop.f32.mrf.mxu0
        %v1536 = vadd.f32 %v1324, %v1535
        %1537 = vmatprep.mubr.f32.mxu0 %v1102
        %1538 = vmatmul.mubr.f32.gmra.mxu0 %v1101
        %v1539 = vpop.f32.mrf.mxu0
        %v1540 = vadd.f32 %v1320, %v1539
        %v1541 = vpop.f32.mrf.mxu0
        %v1542 = vadd.f32 %v1324, %v1541
        %1543 = vmatprep.mubr.f32.mxu0 %v1104
        %1544 = vmatmul.mubr.f32.gmra.mxu0 %v1103
        %v1545 = vpop.f32.mrf.mxu0
        %v1546 = vadd.f32 %v1320, %v1545
        %v1547 = vpop.f32.mrf.mxu0
        %v1548 = vadd.f32 %v1324, %v1547
        %1549 = vmatprep.mubr.f32.mxu0 %v1106
        %1550 = vmatmul.mubr.f32.gmra.mxu0 %v1105
        %v1551 = vpop.f32.mrf.mxu0
        %v1552 = vadd.f32 %v1320, %v1551
        %v1553 = vpop.f32.mrf.mxu0
        %v1554 = vadd.f32 %v1324, %v1553
        %1555 = vmatprep.mubr.f32.mxu0 %v1108
        %1556 = vmatmul.mubr.f32.gmra.mxu0 %v1107
        %v1557 = vpop.f32.mrf.mxu0
        %v1558 = vadd.f32 %v1320, %v1557
        %v1559 = vpop.f32.mrf.mxu0
        %v1560 = vadd.f32 %v1324, %v1559
        %1561 = vmatprep.mubr.f32.mxu0 %v1110
        %1562 = vmatmul.mubr.f32.gmra.mxu0 %v1109
        %v1563 = vpop.f32.mrf.mxu0
        %v1564 = vadd.f32 %v1320, %v1563
        %v1565 = vpop.f32.mrf.mxu0
        %v1566 = vadd.f32 %v1324, %v1565
        %1567 = vmatprep.mubr.f32.mxu0 %v1112
        %1568 = vmatmul.mubr.f32.gmra.mxu0 %v1111
        %v1569 = vpop.f32.mrf.mxu0
        %v1570 = vadd.f32 %v1320, %v1569
        %v1571 = vpop.f32.mrf.mxu0
        %v1572 = vadd.f32 %v1324, %v1571
        %1573 = vmatprep.mubr.f32.mxu0 %v1114
        %1574 = vmatmul.mubr.f32.gmra.mxu0 %v1113
        %v1575 = vpop.f32.mrf.mxu0
        %v1576 = vadd.f32 %v1320, %v1575
        %v1577 = vpop.f32.mrf.mxu0
        %v1578 = vadd.f32 %v1324, %v1577
        %1579 = vmatprep.mubr.f32.mxu0 %v1116
        %1580 = vmatmul.mubr.f32.gmra.mxu0 %v1115
        %v1581 = vpop.f32.mrf.mxu0
        %v1582 = vadd.f32 %v1320, %v1581
        %v1583 = vpop.f32.mrf.mxu0
        %v1584 = vadd.f32 %v1324, %v1583
        %1585 = vmatprep.mubr.f32.mxu0 %v1118
        %1586 = vmatmul.mubr.f32.gmra.mxu0 %v1117
        %v1587 = vpop.f32.mrf.mxu0
        %v1588 = vadd.f32 %v1320, %v1587
        %v1589 = vpop.f32.mrf.mxu0
        %v1590 = vadd.f32 %v1324, %v1589
        %1591 = vmatprep.mubr.f32.mxu0 %v1120
        %1592 = vmatmul.mubr.f32.gmra.mxu0 %v1119
        %v1593 = vpop.f32.mrf.mxu0
        %v1594 = vadd.f32 %v1320, %v1593
        %v1595 = vpop.f32.mrf.mxu0
        %v1596 = vadd.f32 %v1324, %v1595
        %1597 = vmatprep.mubr.f32.mxu0 %v1122
        %1598 = vmatmul.mubr.f32.gmra.mxu0 %v1121
        %v1599 = vpop.f32.mrf.mxu0
        %v1600 = vadd.f32 %v1320, %v1599
        %v1601 = vpop.f32.mrf.mxu0
        %v1602 = vadd.f32 %v1324, %v1601
        %1603 = vdwg.mxu0
        %1604 = vmatprep.subr.mxu0 %v1216
        %1605 = vmatpush1.msra.mxu0 %v1215
        %1606 = vmatprep.subr.mxu0 %v1210
        %1607 = vmatpush1.msra.mxu0 %v1209
        %1608 = vmatprep.subr.mxu0 %v1204
        %1609 = vmatpush1.msra.mxu0 %v1203
        %1610 = vmatprep.subr.mxu0 %v1198
        %1611 = vmatpush1.msra.mxu0 %v1197
        %1612 = vmatprep.subr.mxu0 %v1192
        %1613 = vmatpush1.msra.mxu0 %v1191
        %1614 = vmatprep.subr.mxu0 %v1186
        %1615 = vmatpush1.msra.mxu0 %v1185
        %1616 = vmatprep.subr.mxu0 %v1180
        %1617 = vmatpush1.msra.mxu0 %v1179
        %1618 = vmatprep.subr.mxu0 %v1174
        %1619 = vmatpush1.msra.mxu0 %v1173
        %1620 = vmatprep.subr.mxu0 %v1168
        %1621 = vmatpush1.msra.mxu0 %v1167
        %1622 = vmatprep.subr.mxu0 %v1162
        %1623 = vmatpush1.msra.mxu0 %v1161
        %1624 = vmatprep.subr.mxu0 %v1156
        %1625 = vmatpush1.msra.mxu0 %v1155
        %1626 = vmatprep.subr.mxu0 %v1150
        %1627 = vmatpush1.msra.mxu0 %v1149
        %1628 = vmatprep.subr.mxu0 %v1144
        %1629 = vmatpush1.msra.mxu0 %v1143
        %1630 = vmatprep.subr.mxu0 %v1138
        %1631 = vmatpush1.msra.mxu0 %v1137
        %1632 = vmatprep.subr.mxu0 %v1132
        %1633 = vmatpush1.msra.mxu0 %v1131
        %1634 = vmatprep.subr.mxu0 %v1126
        %1635 = vmatpush1.msra.mxu0 %v1125
        %1636 = vmatprep.subr.mxu0 %v1312
        %1637 = vmatpush2.msra.mxu0 %v1311
        %1638 = vmatprep.subr.mxu0 %v1306
        %1639 = vmatpush2.msra.mxu0 %v1305
        %1640 = vmatprep.subr.mxu0 %v1300
        %1641 = vmatpush2.msra.mxu0 %v1299
        %1642 = vmatprep.subr.mxu0 %v1294
        %1643 = vmatpush2.msra.mxu0 %v1293
        %1644 = vmatprep.subr.mxu0 %v1288
        %1645 = vmatpush2.msra.mxu0 %v1287
        %1646 = vmatprep.subr.mxu0 %v1282
        %1647 = vmatpush2.msra.mxu0 %v1281
        %1648 = vmatprep.subr.mxu0 %v1276
        %1649 = vmatpush2.msra.mxu0 %v1275
        %1650 = vmatprep.subr.mxu0 %v1270
        %1651 = vmatpush2.msra.mxu0 %v1269
        %1652 = vmatprep.subr.mxu0 %v1264
        %1653 = vmatpush2.msra.mxu0 %v1263
        %1654 = vmatprep.subr.mxu0 %v1258
        %1655 = vmatpush2.msra.mxu0 %v1257
        %1656 = vmatprep.subr.mxu0 %v1252
        %1657 = vmatpush2.msra.mxu0 %v1251
        %1658 = vmatprep.subr.mxu0 %v1246
        %1659 = vmatpush2.msra.mxu0 %v1245
        %1660 = vmatprep.subr.mxu0 %v1240
        %1661 = vmatpush2.msra.mxu0 %v1239
        %1662 = vmatprep.subr.mxu0 %v1234
        %1663 = vmatpush2.msra.mxu0 %v1233
        %1664 = vmatprep.subr.mxu0 %v1228
        %1665 = vmatpush2.msra.mxu0 %v1227
        %1666 = vmatprep.subr.mxu0 %v1222
        %1667 = vmatpush2.msra.mxu0 %v1221
        %1668 = vmatprep.mubr.f32.mxu0 %v1060
        %1669 = vmatmul.mubr.f32.gmra.mxu0 %v1059
        %v1670 = vpop.f32.mrf.mxu0
        %v1671 = vadd.f32 %v1328, %v1670
        %v1672 = vpop.f32.mrf.mxu0
        %v1673 = vadd.f32 %v1332, %v1672
        %1674 = vmatprep.mubr.f32.mxu0 %v1062
        %1675 = vmatmul.mubr.f32.gmra.mxu0 %v1061
        %v1676 = vpop.f32.mrf.mxu0
        %v1677 = vadd.f32 %v1328, %v1676
        %v1678 = vpop.f32.mrf.mxu0
        %v1679 = vadd.f32 %v1332, %v1678
        %1680 = vmatprep.mubr.f32.mxu0 %v1064
        %1681 = vmatmul.mubr.f32.gmra.mxu0 %v1063
        %v1682 = vpop.f32.mrf.mxu0
        %v1683 = vadd.f32 %v1328, %v1682
        %v1684 = vpop.f32.mrf.mxu0
        %v1685 = vadd.f32 %v1332, %v1684
        %1686 = vmatprep.mubr.f32.mxu0 %v1066
        %1687 = vmatmul.mubr.f32.gmra.mxu0 %v1065
        %v1688 = vpop.f32.mrf.mxu0
        %v1689 = vadd.f32 %v1328, %v1688
        %v1690 = vpop.f32.mrf.mxu0
        %v1691 = vadd.f32 %v1332, %v1690
        %1692 = vmatprep.mubr.f32.mxu0 %v1068
        %1693 = vmatmul.mubr.f32.gmra.mxu0 %v1067
        %v1694 = vpop.f32.mrf.mxu0
        %v1695 = vadd.f32 %v1328, %v1694
        %v1696 = vpop.f32.mrf.mxu0
        %v1697 = vadd.f32 %v1332, %v1696
        %1698 = vmatprep.mubr.f32.mxu0 %v1070
        %1699 = vmatmul.mubr.f32.gmra.mxu0 %v1069
        %v1700 = vpop.f32.mrf.mxu0
        %v1701 = vadd.f32 %v1328, %v1700
        %v1702 = vpop.f32.mrf.mxu0
        %v1703 = vadd.f32 %v1332, %v1702
        %1704 = vmatprep.mubr.f32.mxu0 %v1072
        %1705 = vmatmul.mubr.f32.gmra.mxu0 %v1071
        %v1706 = vpop.f32.mrf.mxu0
        %v1707 = vadd.f32 %v1328, %v1706
        %v1708 = vpop.f32.mrf.mxu0
        %v1709 = vadd.f32 %v1332, %v1708
        %1710 = vmatprep.mubr.f32.mxu0 %v1074
        %1711 = vmatmul.mubr.f32.gmra.mxu0 %v1073
        %v1712 = vpop.f32.mrf.mxu0
        %v1713 = vadd.f32 %v1328, %v1712
        %v1714 = vpop.f32.mrf.mxu0
        %v1715 = vadd.f32 %v1332, %v1714
        %1716 = vmatprep.mubr.f32.mxu0 %v1076
        %1717 = vmatmul.mubr.f32.gmra.mxu0 %v1075
        %v1718 = vpop.f32.mrf.mxu0
        %v1719 = vadd.f32 %v1328, %v1718
        %v1720 = vpop.f32.mrf.mxu0
        %v1721 = vadd.f32 %v1332, %v1720
        %1722 = vmatprep.mubr.f32.mxu0 %v1078
        %1723 = vmatmul.mubr.f32.gmra.mxu0 %v1077
        %v1724 = vpop.f32.mrf.mxu0
        %v1725 = vadd.f32 %v1328, %v1724
        %v1726 = vpop.f32.mrf.mxu0
        %v1727 = vadd.f32 %v1332, %v1726
        %1728 = vmatprep.mubr.f32.mxu0 %v1080
        %1729 = vmatmul.mubr.f32.gmra.mxu0 %v1079
        %v1730 = vpop.f32.mrf.mxu0
        %v1731 = vadd.f32 %v1328, %v1730
        %v1732 = vpop.f32.mrf.mxu0
        %v1733 = vadd.f32 %v1332, %v1732
        %1734 = vmatprep.mubr.f32.mxu0 %v1082
        %1735 = vmatmul.mubr.f32.gmra.mxu0 %v1081
        %v1736 = vpop.f32.mrf.mxu0
        %v1737 = vadd.f32 %v1328, %v1736
        %v1738 = vpop.f32.mrf.mxu0
        %v1739 = vadd.f32 %v1332, %v1738
        %1740 = vmatprep.mubr.f32.mxu0 %v1084
        %1741 = vmatmul.mubr.f32.gmra.mxu0 %v1083
        %v1742 = vpop.f32.mrf.mxu0
        %v1743 = vadd.f32 %v1328, %v1742
        %v1744 = vpop.f32.mrf.mxu0
        %v1745 = vadd.f32 %v1332, %v1744
        %1746 = vmatprep.mubr.f32.mxu0 %v1086
        %1747 = vmatmul.mubr.f32.gmra.mxu0 %v1085
        %v1748 = vpop.f32.mrf.mxu0
        %v1749 = vadd.f32 %v1328, %v1748
        %v1750 = vpop.f32.mrf.mxu0
        %v1751 = vadd.f32 %v1332, %v1750
        %1752 = vmatprep.mubr.f32.mxu0 %v1088
        %1753 = vmatmul.mubr.f32.gmra.mxu0 %v1087
        %v1754 = vpop.f32.mrf.mxu0
        %v1755 = vadd.f32 %v1328, %v1754
        %v1756 = vpop.f32.mrf.mxu0
        %v1757 = vadd.f32 %v1332, %v1756
        %1758 = vmatprep.mubr.f32.mxu0 %v1090
        %1759 = vmatmul.mubr.f32.gmra.mxu0 %v1089
        %v1760 = vpop.f32.mrf.mxu0
        %v1761 = vadd.f32 %v1328, %v1760
        %v1762 = vpop.f32.mrf.mxu0
        %v1763 = vadd.f32 %v1332, %v1762
        %1764 = vmatprep.mubr.f32.mxu0 %v1092
        %1765 = vmatmul.mubr.f32.gmra.mxu0 %v1091
        %v1766 = vpop.f32.mrf.mxu0
        %v1767 = vadd.f32 %v1328, %v1766
        %v1768 = vpop.f32.mrf.mxu0
        %v1769 = vadd.f32 %v1332, %v1768
        %1770 = vmatprep.mubr.f32.mxu0 %v1094
        %1771 = vmatmul.mubr.f32.gmra.mxu0 %v1093
        %v1772 = vpop.f32.mrf.mxu0
        %v1773 = vadd.f32 %v1328, %v1772
        %v1774 = vpop.f32.mrf.mxu0
        %v1775 = vadd.f32 %v1332, %v1774
        %1776 = vmatprep.mubr.f32.mxu0 %v1096
        %1777 = vmatmul.mubr.f32.gmra.mxu0 %v1095
        %v1778 = vpop.f32.mrf.mxu0
        %v1779 = vadd.f32 %v1328, %v1778
        %v1780 = vpop.f32.mrf.mxu0
        %v1781 = vadd.f32 %v1332, %v1780
        %1782 = vmatprep.mubr.f32.mxu0 %v1098
        %1783 = vmatmul.mubr.f32.gmra.mxu0 %v1097
        %v1784 = vpop.f32.mrf.mxu0
        %v1785 = vadd.f32 %v1328, %v1784
        %v1786 = vpop.f32.mrf.mxu0
        %v1787 = vadd.f32 %v1332, %v1786
        %1788 = vmatprep.mubr.f32.mxu0 %v1100
        %1789 = vmatmul.mubr.f32.gmra.mxu0 %v1099
        %v1790 = vpop.f32.mrf.mxu0
        %v1791 = vadd.f32 %v1328, %v1790
        %v1792 = vpop.f32.mrf.mxu0
        %v1793 = vadd.f32 %v1332, %v1792
        %1794 = vmatprep.mubr.f32.mxu0 %v1102
        %1795 = vmatmul.mubr.f32.gmra.mxu0 %v1101
        %v1796 = vpop.f32.mrf.mxu0
        %v1797 = vadd.f32 %v1328, %v1796
        %v1798 = vpop.f32.mrf.mxu0
        %v1799 = vadd.f32 %v1332, %v1798
        %1800 = vmatprep.mubr.f32.mxu0 %v1104
        %1801 = vmatmul.mubr.f32.gmra.mxu0 %v1103
        %v1802 = vpop.f32.mrf.mxu0
        %v1803 = vadd.f32 %v1328, %v1802
        %v1804 = vpop.f32.mrf.mxu0
        %v1805 = vadd.f32 %v1332, %v1804
        %1806 = vmatprep.mubr.f32.mxu0 %v1106
        %1807 = vmatmul.mubr.f32.gmra.mxu0 %v1105
        %v1808 = vpop.f32.mrf.mxu0
        %v1809 = vadd.f32 %v1328, %v1808
        %v1810 = vpop.f32.mrf.mxu0
        %v1811 = vadd.f32 %v1332, %v1810
        %1812 = vmatprep.mubr.f32.mxu0 %v1108
        %1813 = vmatmul.mubr.f32.gmra.mxu0 %v1107
        %v1814 = vpop.f32.mrf.mxu0
        %v1815 = vadd.f32 %v1328, %v1814
        %v1816 = vpop.f32.mrf.mxu0
        %v1817 = vadd.f32 %v1332, %v1816
        %1818 = vmatprep.mubr.f32.mxu0 %v1110
        %1819 = vmatmul.mubr.f32.gmra.mxu0 %v1109
        %v1820 = vpop.f32.mrf.mxu0
        %v1821 = vadd.f32 %v1328, %v1820
        %v1822 = vpop.f32.mrf.mxu0
        %v1823 = vadd.f32 %v1332, %v1822
        %1824 = vmatprep.mubr.f32.mxu0 %v1112
        %1825 = vmatmul.mubr.f32.gmra.mxu0 %v1111
        %v1826 = vpop.f32.mrf.mxu0
        %v1827 = vadd.f32 %v1328, %v1826
        %v1828 = vpop.f32.mrf.mxu0
        %v1829 = vadd.f32 %v1332, %v1828
        %1830 = vmatprep.mubr.f32.mxu0 %v1114
        %1831 = vmatmul.mubr.f32.gmra.mxu0 %v1113
        %v1832 = vpop.f32.mrf.mxu0
        %v1833 = vadd.f32 %v1328, %v1832
        %v1834 = vpop.f32.mrf.mxu0
        %v1835 = vadd.f32 %v1332, %v1834
        %1836 = vmatprep.mubr.f32.mxu0 %v1116
        %1837 = vmatmul.mubr.f32.gmra.mxu0 %v1115
        %v1838 = vpop.f32.mrf.mxu0
        %v1839 = vadd.f32 %v1328, %v1838
        %v1840 = vpop.f32.mrf.mxu0
        %v1841 = vadd.f32 %v1332, %v1840
        %1842 = vmatprep.mubr.f32.mxu0 %v1118
        %1843 = vmatmul.mubr.f32.gmra.mxu0 %v1117
        %v1844 = vpop.f32.mrf.mxu0
        %v1845 = vadd.f32 %v1328, %v1844
        %v1846 = vpop.f32.mrf.mxu0
        %v1847 = vadd.f32 %v1332, %v1846
        %1848 = vmatprep.mubr.f32.mxu0 %v1120
        %1849 = vmatmul.mubr.f32.gmra.mxu0 %v1119
        %v1850 = vpop.f32.mrf.mxu0
        %v1851 = vadd.f32 %v1328, %v1850
        %v1852 = vpop.f32.mrf.mxu0
        %v1853 = vadd.f32 %v1332, %v1852
        %1854 = vmatprep.mubr.f32.mxu0 %v1122
        %1855 = vmatmul.mubr.f32.gmra.mxu0 %v1121
        %v1856 = vpop.f32.mrf.mxu0
        %v1857 = vadd.f32 %v1328, %v1856
        %v1858 = vpop.f32.mrf.mxu0
        %v1859 = vadd.f32 %v1332, %v1858
        %1860 = vdwg.mxu0
        %1861 = vmatprep.subr.mxu0 %v1218
        %1862 = vmatpush1.msra.mxu0 %v1217
        %1863 = vmatprep.subr.mxu0 %v1212
        %1864 = vmatpush1.msra.mxu0 %v1211
        %1865 = vmatprep.subr.mxu0 %v1206
        %1866 = vmatpush1.msra.mxu0 %v1205
        %1867 = vmatprep.subr.mxu0 %v1200
        %1868 = vmatpush1.msra.mxu0 %v1199
        %1869 = vmatprep.subr.mxu0 %v1194
        %1870 = vmatpush1.msra.mxu0 %v1193
        %1871 = vmatprep.subr.mxu0 %v1188
        %1872 = vmatpush1.msra.mxu0 %v1187
        %1873 = vmatprep.subr.mxu0 %v1182
        %1874 = vmatpush1.msra.mxu0 %v1181
        %1875 = vmatprep.subr.mxu0 %v1176
        %1876 = vmatpush1.msra.mxu0 %v1175
        %1877 = vmatprep.subr.mxu0 %v1170
        %1878 = vmatpush1.msra.mxu0 %v1169
        %1879 = vmatprep.subr.mxu0 %v1164
        %1880 = vmatpush1.msra.mxu0 %v1163
        %1881 = vmatprep.subr.mxu0 %v1158
        %1882 = vmatpush1.msra.mxu0 %v1157
        %1883 = vmatprep.subr.mxu0 %v1152
        %1884 = vmatpush1.msra.mxu0 %v1151
        %1885 = vmatprep.subr.mxu0 %v1146
        %1886 = vmatpush1.msra.mxu0 %v1145
        %1887 = vmatprep.subr.mxu0 %v1140
        %1888 = vmatpush1.msra.mxu0 %v1139
        %1889 = vmatprep.subr.mxu0 %v1134
        %1890 = vmatpush1.msra.mxu0 %v1133
        %1891 = vmatprep.subr.mxu0 %v1128
        %1892 = vmatpush1.msra.mxu0 %v1127
        %1893 = vmatprep.subr.mxu0 %v1314
        %1894 = vmatpush2.msra.mxu0 %v1313
        %1895 = vmatprep.subr.mxu0 %v1308
        %1896 = vmatpush2.msra.mxu0 %v1307
        %1897 = vmatprep.subr.mxu0 %v1302
        %1898 = vmatpush2.msra.mxu0 %v1301
        %1899 = vmatprep.subr.mxu0 %v1296
        %1900 = vmatpush2.msra.mxu0 %v1295
        %1901 = vmatprep.subr.mxu0 %v1290
        %1902 = vmatpush2.msra.mxu0 %v1289
        %1903 = vmatprep.subr.mxu0 %v1284
        %1904 = vmatpush2.msra.mxu0 %v1283
        %1905 = vmatprep.subr.mxu0 %v1278
        %1906 = vmatpush2.msra.mxu0 %v1277
        %1907 = vmatprep.subr.mxu0 %v1272
        %1908 = vmatpush2.msra.mxu0 %v1271
        %1909 = vmatprep.subr.mxu0 %v1266
        %1910 = vmatpush2.msra.mxu0 %v1265
        %1911 = vmatprep.subr.mxu0 %v1260
        %1912 = vmatpush2.msra.mxu0 %v1259
        %1913 = vmatprep.subr.mxu0 %v1254
        %1914 = vmatpush2.msra.mxu0 %v1253
        %1915 = vmatprep.subr.mxu0 %v1248
        %1916 = vmatpush2.msra.mxu0 %v1247
        %1917 = vmatprep.subr.mxu0 %v1242
        %1918 = vmatpush2.msra.mxu0 %v1241
        %1919 = vmatprep.subr.mxu0 %v1236
        %1920 = vmatpush2.msra.mxu0 %v1235
        %1921 = vmatprep.subr.mxu0 %v1230
        %1922 = vmatpush2.msra.mxu0 %v1229
        %1923 = vmatprep.subr.mxu0 %v1224
        %1924 = vmatpush2.msra.mxu0 %v1223
        %1925 = vmatprep.mubr.f32.mxu0 %v1060
        %1926 = vmatmul.mubr.f32.gmra.mxu0 %v1059
        %v1927 = vpop.f32.mrf.mxu0
        %v1928 = vadd.f32 %v1336, %v1927
        %v1929 = vpop.f32.mrf.mxu0
        %v1930 = vadd.f32 %v1340, %v1929
        %1931 = vmatprep.mubr.f32.mxu0 %v1062
        %1932 = vmatmul.mubr.f32.gmra.mxu0 %v1061
        %v1933 = vpop.f32.mrf.mxu0
        %v1934 = vadd.f32 %v1336, %v1933
        %v1935 = vpop.f32.mrf.mxu0
        %v1936 = vadd.f32 %v1340, %v1935
        %1937 = vmatprep.mubr.f32.mxu0 %v1064
        %1938 = vmatmul.mubr.f32.gmra.mxu0 %v1063
        %v1939 = vpop.f32.mrf.mxu0
        %v1940 = vadd.f32 %v1336, %v1939
        %v1941 = vpop.f32.mrf.mxu0
        %v1942 = vadd.f32 %v1340, %v1941
        %1943 = vmatprep.mubr.f32.mxu0 %v1066
        %1944 = vmatmul.mubr.f32.gmra.mxu0 %v1065
        %v1945 = vpop.f32.mrf.mxu0
        %v1946 = vadd.f32 %v1336, %v1945
        %v1947 = vpop.f32.mrf.mxu0
        %v1948 = vadd.f32 %v1340, %v1947
        %1949 = vmatprep.mubr.f32.mxu0 %v1068
        %1950 = vmatmul.mubr.f32.gmra.mxu0 %v1067
        %v1951 = vpop.f32.mrf.mxu0
        %v1952 = vadd.f32 %v1336, %v1951
        %v1953 = vpop.f32.mrf.mxu0
        %v1954 = vadd.f32 %v1340, %v1953
        %1955 = vmatprep.mubr.f32.mxu0 %v1070
        %1956 = vmatmul.mubr.f32.gmra.mxu0 %v1069
        %v1957 = vpop.f32.mrf.mxu0
        %v1958 = vadd.f32 %v1336, %v1957
        %v1959 = vpop.f32.mrf.mxu0
        %v1960 = vadd.f32 %v1340, %v1959
        %1961 = vmatprep.mubr.f32.mxu0 %v1072
        %1962 = vmatmul.mubr.f32.gmra.mxu0 %v1071
        %v1963 = vpop.f32.mrf.mxu0
        %v1964 = vadd.f32 %v1336, %v1963
        %v1965 = vpop.f32.mrf.mxu0
        %v1966 = vadd.f32 %v1340, %v1965
        %1967 = vmatprep.mubr.f32.mxu0 %v1074
        %1968 = vmatmul.mubr.f32.gmra.mxu0 %v1073
        %v1969 = vpop.f32.mrf.mxu0
        %v1970 = vadd.f32 %v1336, %v1969
        %v1971 = vpop.f32.mrf.mxu0
        %v1972 = vadd.f32 %v1340, %v1971
        %1973 = vmatprep.mubr.f32.mxu0 %v1076
        %1974 = vmatmul.mubr.f32.gmra.mxu0 %v1075
        %v1975 = vpop.f32.mrf.mxu0
        %v1976 = vadd.f32 %v1336, %v1975
        %v1977 = vpop.f32.mrf.mxu0
        %v1978 = vadd.f32 %v1340, %v1977
        %1979 = vmatprep.mubr.f32.mxu0 %v1078
        %1980 = vmatmul.mubr.f32.gmra.mxu0 %v1077
        %v1981 = vpop.f32.mrf.mxu0
        %v1982 = vadd.f32 %v1336, %v1981
        %v1983 = vpop.f32.mrf.mxu0
        %v1984 = vadd.f32 %v1340, %v1983
        %1985 = vmatprep.mubr.f32.mxu0 %v1080
        %1986 = vmatmul.mubr.f32.gmra.mxu0 %v1079
        %v1987 = vpop.f32.mrf.mxu0
        %v1988 = vadd.f32 %v1336, %v1987
        %v1989 = vpop.f32.mrf.mxu0
        %v1990 = vadd.f32 %v1340, %v1989
        %1991 = vmatprep.mubr.f32.mxu0 %v1082
        %1992 = vmatmul.mubr.f32.gmra.mxu0 %v1081
        %v1993 = vpop.f32.mrf.mxu0
        %v1994 = vadd.f32 %v1336, %v1993
        %v1995 = vpop.f32.mrf.mxu0
        %v1996 = vadd.f32 %v1340, %v1995
        %1997 = vmatprep.mubr.f32.mxu0 %v1084
        %1998 = vmatmul.mubr.f32.gmra.mxu0 %v1083
        %v1999 = vpop.f32.mrf.mxu0
        %v2000 = vadd.f32 %v1336, %v1999
        %v2001 = vpop.f32.mrf.mxu0
        %v2002 = vadd.f32 %v1340, %v2001
        %2003 = vmatprep.mubr.f32.mxu0 %v1086
        %2004 = vmatmul.mubr.f32.gmra.mxu0 %v1085
        %v2005 = vpop.f32.mrf.mxu0
        %v2006 = vadd.f32 %v1336, %v2005
        %v2007 = vpop.f32.mrf.mxu0
        %v2008 = vadd.f32 %v1340, %v2007
        %2009 = vmatprep.mubr.f32.mxu0 %v1088
        %2010 = vmatmul.mubr.f32.gmra.mxu0 %v1087
        %v2011 = vpop.f32.mrf.mxu0
        %v2012 = vadd.f32 %v1336, %v2011
        %v2013 = vpop.f32.mrf.mxu0
        %v2014 = vadd.f32 %v1340, %v2013
        %2015 = vmatprep.mubr.f32.mxu0 %v1090
        %2016 = vmatmul.mubr.f32.gmra.mxu0 %v1089
        %v2017 = vpop.f32.mrf.mxu0
        %v2018 = vadd.f32 %v1336, %v2017
        %v2019 = vpop.f32.mrf.mxu0
        %v2020 = vadd.f32 %v1340, %v2019
        %2021 = vmatprep.mubr.f32.mxu0 %v1092
        %2022 = vmatmul.mubr.f32.gmra.mxu0 %v1091
        %v2023 = vpop.f32.mrf.mxu0
        %v2024 = vadd.f32 %v1336, %v2023
        %v2025 = vpop.f32.mrf.mxu0
        %v2026 = vadd.f32 %v1340, %v2025
        %2027 = vmatprep.mubr.f32.mxu0 %v1094
        %2028 = vmatmul.mubr.f32.gmra.mxu0 %v1093
        %v2029 = vpop.f32.mrf.mxu0
        %v2030 = vadd.f32 %v1336, %v2029
        %v2031 = vpop.f32.mrf.mxu0
        %v2032 = vadd.f32 %v1340, %v2031
        %2033 = vmatprep.mubr.f32.mxu0 %v1096
        %2034 = vmatmul.mubr.f32.gmra.mxu0 %v1095
        %v2035 = vpop.f32.mrf.mxu0
        %v2036 = vadd.f32 %v1336, %v2035
        %v2037 = vpop.f32.mrf.mxu0
        %v2038 = vadd.f32 %v1340, %v2037
        %2039 = vmatprep.mubr.f32.mxu0 %v1098
        %2040 = vmatmul.mubr.f32.gmra.mxu0 %v1097
        %v2041 = vpop.f32.mrf.mxu0
        %v2042 = vadd.f32 %v1336, %v2041
        %v2043 = vpop.f32.mrf.mxu0
        %v2044 = vadd.f32 %v1340, %v2043
        %2045 = vmatprep.mubr.f32.mxu0 %v1100
        %2046 = vmatmul.mubr.f32.gmra.mxu0 %v1099
        %v2047 = vpop.f32.mrf.mxu0
        %v2048 = vadd.f32 %v1336, %v2047
        %v2049 = vpop.f32.mrf.mxu0
        %v2050 = vadd.f32 %v1340, %v2049
        %2051 = vmatprep.mubr.f32.mxu0 %v1102
        %2052 = vmatmul.mubr.f32.gmra.mxu0 %v1101
        %v2053 = vpop.f32.mrf.mxu0
        %v2054 = vadd.f32 %v1336, %v2053
        %v2055 = vpop.f32.mrf.mxu0
        %v2056 = vadd.f32 %v1340, %v2055
        %2057 = vmatprep.mubr.f32.mxu0 %v1104
        %2058 = vmatmul.mubr.f32.gmra.mxu0 %v1103
        %v2059 = vpop.f32.mrf.mxu0
        %v2060 = vadd.f32 %v1336, %v2059
        %v2061 = vpop.f32.mrf.mxu0
        %v2062 = vadd.f32 %v1340, %v2061
        %2063 = vmatprep.mubr.f32.mxu0 %v1106
        %2064 = vmatmul.mubr.f32.gmra.mxu0 %v1105
        %v2065 = vpop.f32.mrf.mxu0
        %v2066 = vadd.f32 %v1336, %v2065
        %v2067 = vpop.f32.mrf.mxu0
        %v2068 = vadd.f32 %v1340, %v2067
        %2069 = vmatprep.mubr.f32.mxu0 %v1108
        %2070 = vmatmul.mubr.f32.gmra.mxu0 %v1107
        %v2071 = vpop.f32.mrf.mxu0
        %v2072 = vadd.f32 %v1336, %v2071
        %v2073 = vpop.f32.mrf.mxu0
        %v2074 = vadd.f32 %v1340, %v2073
        %2075 = vmatprep.mubr.f32.mxu0 %v1110
        %2076 = vmatmul.mubr.f32.gmra.mxu0 %v1109
        %v2077 = vpop.f32.mrf.mxu0
        %v2078 = vadd.f32 %v1336, %v2077
        %v2079 = vpop.f32.mrf.mxu0
        %v2080 = vadd.f32 %v1340, %v2079
        %2081 = vmatprep.mubr.f32.mxu0 %v1112
        %2082 = vmatmul.mubr.f32.gmra.mxu0 %v1111
        %v2083 = vpop.f32.mrf.mxu0
        %v2084 = vadd.f32 %v1336, %v2083
        %v2085 = vpop.f32.mrf.mxu0
        %v2086 = vadd.f32 %v1340, %v2085
        %2087 = vmatprep.mubr.f32.mxu0 %v1114
        %2088 = vmatmul.mubr.f32.gmra.mxu0 %v1113
        %v2089 = vpop.f32.mrf.mxu0
        %v2090 = vadd.f32 %v1336, %v2089
        %v2091 = vpop.f32.mrf.mxu0
        %v2092 = vadd.f32 %v1340, %v2091
        %2093 = vmatprep.mubr.f32.mxu0 %v1116
        %2094 = vmatmul.mubr.f32.gmra.mxu0 %v1115
        %v2095 = vpop.f32.mrf.mxu0
        %v2096 = vadd.f32 %v1336, %v2095
        %v2097 = vpop.f32.mrf.mxu0
        %v2098 = vadd.f32 %v1340, %v2097
        %2099 = vmatprep.mubr.f32.mxu0 %v1118
        %2100 = vmatmul.mubr.f32.gmra.mxu0 %v1117
        %v2101 = vpop.f32.mrf.mxu0
        %v2102 = vadd.f32 %v1336, %v2101
        %v2103 = vpop.f32.mrf.mxu0
        %v2104 = vadd.f32 %v1340, %v2103
        %2105 = vmatprep.mubr.f32.mxu0 %v1120
        %2106 = vmatmul.mubr.f32.gmra.mxu0 %v1119
        %v2107 = vpop.f32.mrf.mxu0
        %v2108 = vadd.f32 %v1336, %v2107
        %v2109 = vpop.f32.mrf.mxu0
        %v2110 = vadd.f32 %v1340, %v2109
        %2111 = vmatprep.mubr.f32.mxu0 %v1122
        %2112 = vmatmul.mubr.f32.gmra.mxu0 %v1121
        %v2113 = vpop.f32.mrf.mxu0
        %v2114 = vadd.f32 %v1336, %v2113
        %v2115 = vpop.f32.mrf.mxu0
        %v2116 = vadd.f32 %v1340, %v2115
        %2117 = vdwg.mxu0
        %2118 = vst [vmem:[%s362] sm:$0xff] %v1414
        %2119 = vst [vmem:[%s362 + $0x8] sm:$0xff] %v1416
        %2120 = vst [vmem:[%s362 + $0x10] sm:$0xff] %v1671
        %2121 = vst [vmem:[%s362 + $0x18] sm:$0xff] %v1673
        %2122 = vst [vmem:[%s362 + $0x20] sm:$0xff] %v1928
        %2123 = vst [vmem:[%s362 + $0x28] sm:$0xff] %v1930
        %2124 = vst [vmem:[%s362 + $0x30] sm:$0xff] %v1420
        %2125 = vst [vmem:[%s362 + $0x38] sm:$0xff] %v1422
        %2126 = vst [vmem:[%s362 + $0x40] sm:$0xff] %v1677
        %2127 = vst [vmem:[%s362 + $0x48] sm:$0xff] %v1679
        %2128 = vst [vmem:[%s362 + $0x50] sm:$0xff] %v1934
        %2129 = vst [vmem:[%s362 + $0x58] sm:$0xff] %v1936
        %2130 = vst [vmem:[%s362 + $0x60] sm:$0xff] %v1426
        %2131 = vst [vmem:[%s362 + $0x68] sm:$0xff] %v1428
        %2132 = vst [vmem:[%s362 + $0x70] sm:$0xff] %v1683
        %2133 = vst [vmem:[%s362 + $0x78] sm:$0xff] %v1685
        %2134 = vst [vmem:[%s362 + $0x80] sm:$0xff] %v1940
        %2135 = vst [vmem:[%s362 + $0x88] sm:$0xff] %v1942
        %2136 = vst [vmem:[%s362 + $0x90] sm:$0xff] %v1432
        %2137 = vst [vmem:[%s362 + $0x98] sm:$0xff] %v1434
        %2138 = vst [vmem:[%s362 + $0xa0] sm:$0xff] %v1689
        %2139 = vst [vmem:[%s362 + $0xa8] sm:$0xff] %v1691
        %2140 = vst [vmem:[%s362 + $0xb0] sm:$0xff] %v1946
        %2141 = vst [vmem:[%s362 + $0xb8] sm:$0xff] %v1948
        %2142 = vst [vmem:[%s362 + $0xc0] sm:$0xff] %v1438
        %2143 = vst [vmem:[%s362 + $0xc8] sm:$0xff] %v1440
        %2144 = vst [vmem:[%s362 + $0xd0] sm:$0xff] %v1695
        %2145 = vst [vmem:[%s362 + $0xd8] sm:$0xff] %v1697
        %2146 = vst [vmem:[%s362 + $0xe0] sm:$0xff] %v1952
        %2147 = vst [vmem:[%s362 + $0xe8] sm:$0xff] %v1954
        %2148 = vst [vmem:[%s362 + $0xf0] sm:$0xff] %v1444
        %2149 = vst [vmem:[%s362 + $0xf8] sm:$0xff] %v1446
        %2150 = vst [vmem:[%s362 + $0x100] sm:$0xff] %v1701
        %2151 = vst [vmem:[%s362 + $0x108] sm:$0xff] %v1703
        %2152 = vst [vmem:[%s362 + $0x110] sm:$0xff] %v1958
        %2153 = vst [vmem:[%s362 + $0x118] sm:$0xff] %v1960
        %2154 = vst [vmem:[%s362 + $0x120] sm:$0xff] %v1450
        %2155 = vst [vmem:[%s362 + $0x128] sm:$0xff] %v1452
        %2156 = vst [vmem:[%s362 + $0x130] sm:$0xff] %v1707
        %2157 = vst [vmem:[%s362 + $0x138] sm:$0xff] %v1709
        %2158 = vst [vmem:[%s362 + $0x140] sm:$0xff] %v1964
        %2159 = vst [vmem:[%s362 + $0x148] sm:$0xff] %v1966
        %2160 = vst [vmem:[%s362 + $0x150] sm:$0xff] %v1456
        %2161 = vst [vmem:[%s362 + $0x158] sm:$0xff] %v1458
        %2162 = vst [vmem:[%s362 + $0x160] sm:$0xff] %v1713
        %2163 = vst [vmem:[%s362 + $0x168] sm:$0xff] %v1715
        %2164 = vst [vmem:[%s362 + $0x170] sm:$0xff] %v1970
        %2165 = vst [vmem:[%s362 + $0x178] sm:$0xff] %v1972
        %2166 = vst [vmem:[%s362 + $0x180] sm:$0xff] %v1462
        %2167 = vst [vmem:[%s362 + $0x188] sm:$0xff] %v1464
        %2168 = vst [vmem:[%s362 + $0x190] sm:$0xff] %v1719
        %2169 = vst [vmem:[%s362 + $0x198] sm:$0xff] %v1721
        %2170 = vst [vmem:[%s362 + $0x1a0] sm:$0xff] %v1976
        %2171 = vst [vmem:[%s362 + $0x1a8] sm:$0xff] %v1978
        %2172 = vst [vmem:[%s362 + $0x1b0] sm:$0xff] %v1468
        %2173 = vst [vmem:[%s362 + $0x1b8] sm:$0xff] %v1470
        %2174 = vst [vmem:[%s362 + $0x1c0] sm:$0xff] %v1725
        %2175 = vst [vmem:[%s362 + $0x1c8] sm:$0xff] %v1727
        %2176 = vst [vmem:[%s362 + $0x1d0] sm:$0xff] %v1982
        %2177 = vst [vmem:[%s362 + $0x1d8] sm:$0xff] %v1984
        %2178 = vst [vmem:[%s362 + $0x1e0] sm:$0xff] %v1474
        %2179 = vst [vmem:[%s362 + $0x1e8] sm:$0xff] %v1476
        %2180 = vst [vmem:[%s362 + $0x1f0] sm:$0xff] %v1731
        %2181 = vst [vmem:[%s362 + $0x1f8] sm:$0xff] %v1733
        %2182 = vst [vmem:[%s362 + $0x200] sm:$0xff] %v1988
        %2183 = vst [vmem:[%s362 + $0x208] sm:$0xff] %v1990
        %2184 = vst [vmem:[%s362 + $0x210] sm:$0xff] %v1480
        %2185 = vst [vmem:[%s362 + $0x218] sm:$0xff] %v1482
        %2186 = vst [vmem:[%s362 + $0x220] sm:$0xff] %v1737
        %2187 = vst [vmem:[%s362 + $0x228] sm:$0xff] %v1739
        %2188 = vst [vmem:[%s362 + $0x230] sm:$0xff] %v1994
        %2189 = vst [vmem:[%s362 + $0x238] sm:$0xff] %v1996
        %2190 = vst [vmem:[%s362 + $0x240] sm:$0xff] %v1486
        %2191 = vst [vmem:[%s362 + $0x248] sm:$0xff] %v1488
        %2192 = vst [vmem:[%s362 + $0x250] sm:$0xff] %v1743
        %2193 = vst [vmem:[%s362 + $0x258] sm:$0xff] %v1745
        %2194 = vst [vmem:[%s362 + $0x260] sm:$0xff] %v2000
        %2195 = vst [vmem:[%s362 + $0x268] sm:$0xff] %v2002
        %2196 = vst [vmem:[%s362 + $0x270] sm:$0xff] %v1492
        %2197 = vst [vmem:[%s362 + $0x278] sm:$0xff] %v1494
        %2198 = vst [vmem:[%s362 + $0x280] sm:$0xff] %v1749
        %2199 = vst [vmem:[%s362 + $0x288] sm:$0xff] %v1751
        %2200 = vst [vmem:[%s362 + $0x290] sm:$0xff] %v2006
        %2201 = vst [vmem:[%s362 + $0x298] sm:$0xff] %v2008
        %2202 = vst [vmem:[%s362 + $0x2a0] sm:$0xff] %v1498
        %2203 = vst [vmem:[%s362 + $0x2a8] sm:$0xff] %v1500
        %2204 = vst [vmem:[%s362 + $0x2b0] sm:$0xff] %v1755
        %2205 = vst [vmem:[%s362 + $0x2b8] sm:$0xff] %v1757
        %2206 = vst [vmem:[%s362 + $0x2c0] sm:$0xff] %v2012
        %2207 = vst [vmem:[%s362 + $0x2c8] sm:$0xff] %v2014
        %2208 = vst [vmem:[%s362 + $0x2d0] sm:$0xff] %v1504
        %2209 = vst [vmem:[%s362 + $0x2d8] sm:$0xff] %v1506
        %2210 = vst [vmem:[%s362 + $0x2e0] sm:$0xff] %v1761
        %2211 = vst [vmem:[%s362 + $0x2e8] sm:$0xff] %v1763
        %2212 = vst [vmem:[%s362 + $0x2f0] sm:$0xff] %v2018
        %2213 = vst [vmem:[%s362 + $0x2f8] sm:$0xff] %v2020
        %2214 = vst [vmem:[%s362 + $0x300] sm:$0xff] %v1510
        %2215 = vst [vmem:[%s362 + $0x308] sm:$0xff] %v1512
        %2216 = vst [vmem:[%s362 + $0x310] sm:$0xff] %v1767
        %2217 = vst [vmem:[%s362 + $0x318] sm:$0xff] %v1769
        %2218 = vst [vmem:[%s362 + $0x320] sm:$0xff] %v2024
        %2219 = vst [vmem:[%s362 + $0x328] sm:$0xff] %v2026
        %2220 = vst [vmem:[%s362 + $0x330] sm:$0xff] %v1516
        %2221 = vst [vmem:[%s362 + $0x338] sm:$0xff] %v1518
        %2222 = vst [vmem:[%s362 + $0x340] sm:$0xff] %v1773
        %2223 = vst [vmem:[%s362 + $0x348] sm:$0xff] %v1775
        %2224 = vst [vmem:[%s362 + $0x350] sm:$0xff] %v2030
        %2225 = vst [vmem:[%s362 + $0x358] sm:$0xff] %v2032
        %2226 = vst [vmem:[%s362 + $0x360] sm:$0xff] %v1522
        %2227 = vst [vmem:[%s362 + $0x368] sm:$0xff] %v1524
        %2228 = vst [vmem:[%s362 + $0x370] sm:$0xff] %v1779
        %2229 = vst [vmem:[%s362 + $0x378] sm:$0xff] %v1781
        %2230 = vst [vmem:[%s362 + $0x380] sm:$0xff] %v2036
        %2231 = vst [vmem:[%s362 + $0x388] sm:$0xff] %v2038
        %2232 = vst [vmem:[%s362 + $0x390] sm:$0xff] %v1528
        %2233 = vst [vmem:[%s362 + $0x398] sm:$0xff] %v1530
        %2234 = vst [vmem:[%s362 + $0x3a0] sm:$0xff] %v1785
        %2235 = vst [vmem:[%s362 + $0x3a8] sm:$0xff] %v1787
        %2236 = vst [vmem:[%s362 + $0x3b0] sm:$0xff] %v2042
        %2237 = vst [vmem:[%s362 + $0x3b8] sm:$0xff] %v2044
        %2238 = vst [vmem:[%s362 + $0x3c0] sm:$0xff] %v1534
        %2239 = vst [vmem:[%s362 + $0x3c8] sm:$0xff] %v1536
        %2240 = vst [vmem:[%s362 + $0x3d0] sm:$0xff] %v1791
        %2241 = vst [vmem:[%s362 + $0x3d8] sm:$0xff] %v1793
        %2242 = vst [vmem:[%s362 + $0x3e0] sm:$0xff] %v2048
        %2243 = vst [vmem:[%s362 + $0x3e8] sm:$0xff] %v2050
        %2244 = vst [vmem:[%s362 + $0x3f0] sm:$0xff] %v1540
        %2245 = vst [vmem:[%s362 + $0x3f8] sm:$0xff] %v1542
        %2246 = vst [vmem:[%s362 + $0x400] sm:$0xff] %v1797
        %2247 = vst [vmem:[%s362 + $0x408] sm:$0xff] %v1799
        %2248 = vst [vmem:[%s362 + $0x410] sm:$0xff] %v2054
        %2249 = vst [vmem:[%s362 + $0x418] sm:$0xff] %v2056
        %2250 = vst [vmem:[%s362 + $0x420] sm:$0xff] %v1546
        %2251 = vst [vmem:[%s362 + $0x428] sm:$0xff] %v1548
        %2252 = vst [vmem:[%s362 + $0x430] sm:$0xff] %v1803
        %2253 = vst [vmem:[%s362 + $0x438] sm:$0xff] %v1805
        %2254 = vst [vmem:[%s362 + $0x440] sm:$0xff] %v2060
        %2255 = vst [vmem:[%s362 + $0x448] sm:$0xff] %v2062
        %2256 = vst [vmem:[%s362 + $0x450] sm:$0xff] %v1552
        %2257 = vst [vmem:[%s362 + $0x458] sm:$0xff] %v1554
        %2258 = vst [vmem:[%s362 + $0x460] sm:$0xff] %v1809
        %2259 = vst [vmem:[%s362 + $0x468] sm:$0xff] %v1811
        %2260 = vst [vmem:[%s362 + $0x470] sm:$0xff] %v2066
        %2261 = vst [vmem:[%s362 + $0x478] sm:$0xff] %v2068
        %2262 = vst [vmem:[%s362 + $0x480] sm:$0xff] %v1558
        %2263 = vst [vmem:[%s362 + $0x488] sm:$0xff] %v1560
        %2264 = vst [vmem:[%s362 + $0x490] sm:$0xff] %v1815
        %2265 = vst [vmem:[%s362 + $0x498] sm:$0xff] %v1817
        %2266 = vst [vmem:[%s362 + $0x4a0] sm:$0xff] %v2072
        %2267 = vst [vmem:[%s362 + $0x4a8] sm:$0xff] %v2074
        %2268 = vst [vmem:[%s362 + $0x4b0] sm:$0xff] %v1564
        %2269 = vst [vmem:[%s362 + $0x4b8] sm:$0xff] %v1566
        %2270 = vst [vmem:[%s362 + $0x4c0] sm:$0xff] %v1821
        %2271 = vst [vmem:[%s362 + $0x4c8] sm:$0xff] %v1823
        %2272 = vst [vmem:[%s362 + $0x4d0] sm:$0xff] %v2078
        %2273 = vst [vmem:[%s362 + $0x4d8] sm:$0xff] %v2080
        %2274 = vst [vmem:[%s362 + $0x4e0] sm:$0xff] %v1570
        %2275 = vst [vmem:[%s362 + $0x4e8] sm:$0xff] %v1572
        %2276 = vst [vmem:[%s362 + $0x4f0] sm:$0xff] %v1827
        %2277 = vst [vmem:[%s362 + $0x4f8] sm:$0xff] %v1829
        %2278 = vst [vmem:[%s362 + $0x500] sm:$0xff] %v2084
        %2279 = vst [vmem:[%s362 + $0x508] sm:$0xff] %v2086
        %2280 = vst [vmem:[%s362 + $0x510] sm:$0xff] %v1576
        %2281 = vst [vmem:[%s362 + $0x518] sm:$0xff] %v1578
        %2282 = vst [vmem:[%s362 + $0x520] sm:$0xff] %v1833
        %2283 = vst [vmem:[%s362 + $0x528] sm:$0xff] %v1835
        %2284 = vst [vmem:[%s362 + $0x530] sm:$0xff] %v2090
        %2285 = vst [vmem:[%s362 + $0x538] sm:$0xff] %v2092
        %2286 = vst [vmem:[%s362 + $0x540] sm:$0xff] %v1582
        %2287 = vst [vmem:[%s362 + $0x548] sm:$0xff] %v1584
        %2288 = vst [vmem:[%s362 + $0x550] sm:$0xff] %v1839
        %2289 = vst [vmem:[%s362 + $0x558] sm:$0xff] %v1841
        %2290 = vst [vmem:[%s362 + $0x560] sm:$0xff] %v2096
        %2291 = vst [vmem:[%s362 + $0x568] sm:$0xff] %v2098
        %2292 = vst [vmem:[%s362 + $0x570] sm:$0xff] %v1588
        %2293 = vst [vmem:[%s362 + $0x578] sm:$0xff] %v1590
        %2294 = vst [vmem:[%s362 + $0x580] sm:$0xff] %v1845
        %2295 = vst [vmem:[%s362 + $0x588] sm:$0xff] %v1847
        %2296 = vst [vmem:[%s362 + $0x590] sm:$0xff] %v2102
        %2297 = vst [vmem:[%s362 + $0x598] sm:$0xff] %v2104
        %2298 = vst [vmem:[%s362 + $0x5a0] sm:$0xff] %v1594
        %2299 = vst [vmem:[%s362 + $0x5a8] sm:$0xff] %v1596
        %2300 = vst [vmem:[%s362 + $0x5b0] sm:$0xff] %v1851
        %2301 = vst [vmem:[%s362 + $0x5b8] sm:$0xff] %v1853
        %2302 = vst [vmem:[%s362 + $0x5c0] sm:$0xff] %v2108
        %2303 = vst [vmem:[%s362 + $0x5c8] sm:$0xff] %v2110
        %2304 = vst [vmem:[%s362 + $0x5d0] sm:$0xff] %v1600
        %2305 = vst [vmem:[%s362 + $0x5d8] sm:$0xff] %v1602
        %2306 = vst [vmem:[%s362 + $0x5e0] sm:$0xff] %v1857
        %2307 = vst [vmem:[%s362 + $0x5e8] sm:$0xff] %v1859
        %2308 = vst [vmem:[%s362 + $0x5f0] sm:$0xff] %v2114
        %2309 = vst [vmem:[%s362 + $0x5f8] sm:$0xff] %v2116
        %s2310 = smul.u32 32, %s22
        %p2311 = scmp.lt.s32.totalorder %s2310, 63
        %s2312 = scalar_select %p2311, %s2310, 63
        %s2313 = smul.addr %s2312, 6
        %s2314 = smul.addr %s2313, 8
        %s2315 = scalar_lea.vmem %s7, %s2314
        // Predicated region
        $region73: #{gripper_decoder_forward.1} parent=47 // pred_check
          %p2316 = pneg %p192
        $region74: #{gripper_decoder_forward.1} parent=47 // pred_check_branch
          %2318 = sbr.rel (%p2316) target = $region76
        $region75: #{gripper_decoder_forward.1} parent=47 // pred_region
          %s2319 = smul.u32 32, %s22
        $region76: #{gripper_decoder_forward.1} parent=47 // pred_fallthru
          _
      $region48: #{gripper_decoder_forward.1} parent=5 // pred_fallthru
        _
      %p2320 = scmp.le.s32.totalorder 2, %s17
      // Predicated region
      $region77: #{gripper_decoder_forward.1} parent=5 // pred_check
        %p2321 = pneg %p2320
      $region78: #{gripper_decoder_forward.1} parent=5 // pred_check_branch
        %2323 = sbr.rel (%p2321) target = $region80
      $region79: #{gripper_decoder_forward.1} parent=5 // pred_region
        %s2324 = ssub.s32 %s17, 2
        // Predicated region
        $region81: #{gripper_decoder_forward.1} parent=79 // pred_check
          %p2325 = pneg %p198
        $region82: #{gripper_decoder_forward.1} parent=79 // pred_check_branch
          %2327 = sbr.rel (%p2325) target = $region84
        $region83: #{gripper_decoder_forward.1} parent=79 // pred_region
          %s2328 = smul.u32 32, %s23
          %p2329 = scmp.lt.s32.totalorder %s2328, 63
          %s2330 = scalar_select %p2329, %s2328, 63
          %s2331 = smul.addr %s2330, 6
          %s2332 = smul.addr %s2331, 8
          %s2333 = scalar_lea.vmem %s7, %s2332
        $region84: #{gripper_decoder_forward.1} parent=79 // pred_fallthru
          _
      $region80: #{gripper_decoder_forward.1} parent=5 // pred_fallthru
        _
    $region6: #{gripper_decoder_forward.1} parent=1 // loop_footer
      %s21 = sadd.s32 1, %s17
    $region7: #{gripper_decoder_forward.1} parent=1 // loop_footer_branch
      %16 = sbr.rel target = $region3
    $region8: #{gripper_decoder_forward.1} parent=1 // loop_exit
      _
    %2334 = vsyncpa [#allocation3], 1
    %s2335 = scalar_lea.sflag [#allocation3], 1
    %2336 = vsyncpa %s2335, 1
    %2337 = vsyncpa [#allocation5], 1
    %2338 = vsyncpa [#allocation8], 1
    %2339 = vsyncpa [#allocation11], 1

</llo_original>
